<compile_context>
chip_gen: v7x
topology: tpu7x:2x2x1
jax: 0.10.0
libtpu: 0.0.40
codegen_flags: <defaults>
</compile_context>

<pallas_src>
import jax
import jax.numpy as jnp
from jax.experimental import pallas as pl
from jax.experimental.pallas import tpu as pltpu


def _round_up(x, m):
    return ((x + m - 1) // m) * m


# ----------------------------------------------------------------------------
# Fused Pallas kernel: all GIN layers + pooling + prediction head
# ----------------------------------------------------------------------------
def _fused_gnn_kernel(adj_ref, h0_ref, eb_ref, w1_ref, b1_ref, w2_ref, b2_ref,
                      pool_ref, pw_ref, pb_ref, g_ref, o_ref, h_scr):
    layer = pl.program_id(0)
    n_layers = pl.num_programs(0)

    # Initialize the resident node-feature scratch on the first layer.
    @pl.when(layer == 0)
    def _():
        h_scr[...] = h0_ref[...]

    # Message aggregation over neighbours (+ self loops baked into A) plus the
    # additive bond-embedding contribution.  bf16 MXU inputs, f32 accumulate.
    agg = jnp.dot(adj_ref[...], h_scr[...].astype(jnp.bfloat16),
                  preferred_element_type=jnp.float32) + eb_ref[...]

    # GIN MLP: Linear(D, 2D) -> ReLU -> Linear(2D, D)
    z = jnp.dot(agg.astype(jnp.bfloat16), w1_ref[...],
                preferred_element_type=jnp.float32) + b1_ref[...]
    z = jnp.maximum(z, 0.0)
    h_new = jnp.dot(z.astype(jnp.bfloat16), w2_ref[...],
                    preferred_element_type=jnp.float32) + b2_ref[...]

    is_last = layer == n_layers - 1

    # Inter-layer ReLU (not applied after the last layer, JK == 'last').
    @pl.when(jnp.logical_not(is_last))
    def _():
        h_scr[...] = jnp.maximum(h_new, 0.0)

    # Final layer: fuse graph pooling + graph_pred_linear head.
    @pl.when(is_last)
    def _():
        g = jnp.dot(pool_ref[...], h_new.astype(jnp.bfloat16),
                    preferred_element_type=jnp.float32)
        g_ref[...] = g
        o_ref[...] = jnp.dot(g.astype(jnp.bfloat16), pw_ref[...],
                             preferred_element_type=jnp.float32) + pb_ref[...]


def fused_gnn_forward(adj, h0, eb, w1s, b1s, w2s, b2s, pool, pw, pb, *,
                      num_layer, n_pad, b_pad, d_pad, h_pad, t_pad):
    grid_spec = pltpu.PrefetchScalarGridSpec(
        num_scalar_prefetch=0,
        grid=(num_layer,),
        in_specs=[
            pl.BlockSpec((n_pad, n_pad), lambda l: (0, 0)),          # adjacency (resident)
            pl.BlockSpec((n_pad, d_pad), lambda l: (0, 0)),          # initial node emb
            pl.BlockSpec((n_pad, d_pad), lambda l: (0, 0)),          # bond-emb bias
            pl.BlockSpec((None, d_pad, h_pad), lambda l: (l, 0, 0)),  # w1 per layer
            pl.BlockSpec((None, 1, h_pad), lambda l: (l, 0, 0)),      # b1 per layer
            pl.BlockSpec((None, h_pad, d_pad), lambda l: (l, 0, 0)),  # w2 per layer
            pl.BlockSpec((None, 1, d_pad), lambda l: (l, 0, 0)),      # b2 per layer
            pl.BlockSpec((b_pad, n_pad), lambda l: (0, 0)),          # pooling matrix
            pl.BlockSpec((d_pad, t_pad), lambda l: (0, 0)),          # pred head W
            pl.BlockSpec((1, t_pad), lambda l: (0, 0)),              # pred head b
        ],
        out_specs=(
            pl.BlockSpec((b_pad, d_pad), lambda l: (0, 0)),          # graph rep
            pl.BlockSpec((b_pad, t_pad), lambda l: (0, 0)),          # prediction
        ),
        scratch_shapes=[pltpu.VMEM((n_pad, d_pad), jnp.float32)],    # resident h
    )
    return pl.pallas_call(
        _fused_gnn_kernel,
        grid_spec=grid_spec,
        out_shape=(jax.ShapeDtypeStruct((b_pad, d_pad), jnp.float32),
                   jax.ShapeDtypeStruct((b_pad, t_pad), jnp.float32)),
        compiler_params=pltpu.CompilerParams(
            dimension_semantics=("arbitrary",),
            vmem_limit_bytes=32 * 1024 * 1024),
    )(adj, h0, eb, w1s, b1s, w2s, b2s, pool, pw, pb)


# ----------------------------------------------------------------------------
# GNN_graphpred in JAX (parameter setup + glue in plain JAX, hot path in Pallas)
# ----------------------------------------------------------------------------
class GNNGraphPredPallas:
    NUM_ATOM_TYPES = 120
    NUM_BOND_TYPES = 6

    def __init__(self, num_layer, emb_dim, num_tasks, JK='last',
                 graph_pooling='mean', key=None):
        if num_layer < 2:
            raise ValueError('# layers must > 1.')
        if JK != 'last':
            raise ValueError('only JK="last" is implemented here.')
        if graph_pooling not in ('mean', 'sum'):
            raise ValueError('only mean/sum pooling implemented here.')
        self.num_layer = num_layer
        self.emb_dim = emb_dim
        self.num_tasks = num_tasks
        self.JK = JK
        self.graph_pooling = graph_pooling

        # Lane-dense padded sizes (multiples of 128 on the lane axis).
        self.d_pad = _round_up(emb_dim, 128)
        self.h_pad = _round_up(2 * emb_dim, 128)
        self.t_pad = _round_up(num_tasks, 128)

        key = jax.random.PRNGKey(0) if key is None else key

        def init(k, shape, scale=0.1):
            return (scale * jax.random.normal(k, shape)).astype(jnp.float32)

        k_atom, k_bond, k_pred, k_layers = jax.random.split(key, 4)
        self.atom_emb = init(k_atom, (self.NUM_ATOM_TYPES, emb_dim))
        self.bond_emb = init(k_bond, (self.NUM_BOND_TYPES, emb_dim))

        w1_l, b1_l, w2_l, b2_l = [], [], [], []
        for layer in range(num_layer):
            k1, k2 = jax.random.split(jax.random.fold_in(k_layers, layer))
            w1 = init(k1, (emb_dim, 2 * emb_dim))
            w2 = init(k2, (2 * emb_dim, emb_dim))
            w1_l.append(jnp.pad(w1, ((0, self.d_pad - emb_dim),
                                     (0, self.h_pad - 2 * emb_dim))))
            w2_l.append(jnp.pad(w2, ((0, self.h_pad - 2 * emb_dim),
                                     (0, self.d_pad - emb_dim))))
            b1_l.append(jnp.zeros((1, self.h_pad), jnp.float32))
            b2_l.append(jnp.zeros((1, self.d_pad), jnp.float32))
        # Stacked per-layer weights: selected inside the kernel grid via index_map.
        self.w1s = jnp.stack(w1_l).astype(jnp.bfloat16)   # (L, D_pad, H_pad)
        self.b1s = jnp.stack(b1_l)                        # (L, 1, H_pad)  f32
        self.w2s = jnp.stack(w2_l).astype(jnp.bfloat16)   # (L, H_pad, D_pad)
        self.b2s = jnp.stack(b2_l)                        # (L, 1, D_pad)  f32

        # graph_pred_linear: nn.Linear(emb_dim, num_tasks)  (stored transposed)
        pw = init(k_pred, (emb_dim, num_tasks))
        self.pred_w = jnp.pad(pw, ((0, self.d_pad - emb_dim),
                                   (0, self.t_pad - num_tasks))).astype(jnp.bfloat16)
        self.pred_b = jnp.zeros((1, self.t_pad), jnp.float32)

    def __call__(self, x, edge_index, edge_attr, batch, num_graphs):
        n = int(x.shape[0])
        n_pad = _round_up(max(n, 8), 128)      # lane-dense contraction / adj width
        b_pad = _round_up(max(int(num_graphs), 1), 8)

        src, dst = edge_index[0], edge_index[1]

        # --- glue: dense adjacency with self loops (padded, bf16) -----------
        adj = jnp.zeros((n_pad, n_pad), jnp.float32).at[dst, src].add(1.0)
        idx = jnp.arange(n)
        adj = adj.at[idx, idx].add(1.0)                      # self loops
        adj = adj.astype(jnp.bfloat16)                       # 0/1/... exact in bf16

        # --- glue: bond-embedding bias (padded, f32) -------------------------
        edge_emb = self.bond_emb[edge_attr]                  # (E, D)
        eb = jnp.zeros((n, self.emb_dim), jnp.float32).at[dst].add(edge_emb)
        eb = eb + self.bond_emb[self.NUM_BOND_TYPES - 1][None, :]  # self-loop attr
        eb = jnp.pad(eb, ((0, n_pad - n), (0, self.d_pad - self.emb_dim)))

        # --- glue: node embedding lookup (padded, f32) ------------------------
        h0 = self.atom_emb[x]                                # (N, D)
        h0 = jnp.pad(h0, ((0, n_pad - n), (0, self.d_pad - self.emb_dim)))

        # --- glue: pooling matrix (mean or sum over graph segments) ----------
        one_hot = (batch[None, :] == jnp.arange(num_graphs)[:, None]).astype(
            jnp.float32)                                     # (B, N)
        if self.graph_pooling == 'mean':
            counts = jnp.maximum(one_hot.sum(axis=1, keepdims=True), 1.0)
            pool = one_hot / counts
        else:
            pool = one_hot
        pool = jnp.pad(pool, ((0, b_pad - num_graphs), (0, n_pad - n)))
        pool = pool.astype(jnp.bfloat16)

        # --- single fused Pallas kernel: GIN stack + pooling + pred head -----
        g_pad, o_pad = fused_gnn_forward(
            adj, h0, eb, self.w1s, self.b1s, self.w2s, self.b2s,
            pool, self.pred_w, self.pred_b,
            num_layer=self.num_layer, n_pad=n_pad, b_pad=b_pad,
            d_pad=self.d_pad, h_pad=self.h_pad, t_pad=self.t_pad)

        graph_representation = g_pad[:num_graphs, :self.emb_dim]
        output = o_pad[:num_graphs, :self.num_tasks]
        return graph_representation, output


# ----------------------------------------------------------------------------
if __name__ == '__main__':
    key = jax.random.PRNGKey(0)

    num_layer = 3
    emb_dim = 32
    num_tasks = 4
    num_graphs = 2
    nodes_per_graph = 8
    n_nodes = num_graphs * nodes_per_graph                 # 16

    # deterministic synthetic molecular graph batch
    k_x, k_e = jax.random.split(key)
    x = jax.random.randint(k_x, (n_nodes,), 0, GNNGraphPredPallas.NUM_ATOM_TYPES)

    # chain edges within each graph, both directions
    srcs, dsts = [], []
    for g in range(num_graphs):
        base = g * nodes_per_graph
        for i in range(nodes_per_graph - 1):
            srcs += [base + i, base + i + 1]
            dsts += [base + i + 1, base + i]
    edge_index = jnp.array([srcs, dsts], dtype=jnp.int32)  # (2, E)
    n_edges = edge_index.shape[1]
    edge_attr = jax.random.randint(
        k_e, (n_edges,), 0, GNNGraphPredPallas.NUM_BOND_TYPES - 1)
    batch = jnp.repeat(jnp.arange(num_graphs, dtype=jnp.int32), nodes_per_graph)

    model = GNNGraphPredPallas(num_layer, emb_dim, num_tasks,
                               JK='last', graph_pooling='mean',
                               key=jax.random.PRNGKey(0))

    graph_rep, out = model(x, edge_index, edge_attr, batch, num_graphs)
    jax.block_until_ready((graph_rep, out))

    assert graph_rep.shape == (num_graphs, emb_dim)
    assert out.shape == (num_graphs, num_tasks)
    assert bool(jnp.all(jnp.isfinite(graph_rep))) and bool(jnp.all(jnp.isfinite(out)))
    print("KERNEL_OK")
</pallas_src>

<mosaic_0001>
module attributes {stable_mosaic.version = 11 : i64} {
  func.func @_fused_gnn_kernel(%arg0: i32, %arg1: memref<128x128xbf16, #tpu.memory_space<vmem>>, %arg2: memref<128x128xf32, #tpu.memory_space<vmem>>, %arg3: memref<128x128xf32, #tpu.memory_space<vmem>>, %arg4: memref<1x128x128xbf16, #tpu.memory_space<vmem>>, %arg5: memref<1x1x128xf32, #tpu.memory_space<vmem>>, %arg6: memref<1x128x128xbf16, #tpu.memory_space<vmem>>, %arg7: memref<1x1x128xf32, #tpu.memory_space<vmem>>, %arg8: memref<8x128xbf16, #tpu.memory_space<vmem>>, %arg9: memref<128x128xbf16, #tpu.memory_space<vmem>>, %arg10: memref<1x128xf32, #tpu.memory_space<vmem>>, %arg11: memref<8x128xf32, #tpu.memory_space<vmem>>, %arg12: memref<8x128xf32, #tpu.memory_space<vmem>>, %arg13: memref<128x128xf32, #tpu.memory_space<vmem>>) attributes {dimension_semantics = [#tpu.dimension_semantics<arbitrary>], iteration_bounds = array<i64: 3>, scalar_prefetch = 0 : i64, scratch_operands = 1 : i64, tpu.core_type = #tpu.core_type<tc>, window_params = [{pipeline_mode = #tpu.pipeline_mode<synchronous>, transform_indices = @transform_0, window_bounds = array<i64: 128, 128>}, {pipeline_mode = #tpu.pipeline_mode<synchronous>, transform_indices = @transform_1, window_bounds = array<i64: 128, 128>}, {pipeline_mode = #tpu.pipeline_mode<synchronous>, transform_indices = @transform_2, window_bounds = array<i64: 128, 128>}, {transform_indices = @transform_3, window_bounds = array<i64: 1, 128, 128>}, {transform_indices = @transform_4, window_bounds = array<i64: 1, 1, 128>}, {transform_indices = @transform_5, window_bounds = array<i64: 1, 128, 128>}, {transform_indices = @transform_6, window_bounds = array<i64: 1, 1, 128>}, {pipeline_mode = #tpu.pipeline_mode<synchronous>, transform_indices = @transform_7, window_bounds = array<i64: 8, 128>}, {pipeline_mode = #tpu.pipeline_mode<synchronous>, transform_indices = @transform_8, window_bounds = array<i64: 128, 128>}, {pipeline_mode = #tpu.pipeline_mode<synchronous>, transform_indices = @transform_9, window_bounds = array<i64: 1, 128>}, {pipeline_mode = #tpu.pipeline_mode<synchronous>, transform_indices = @transform_10, window_bounds = array<i64: 8, 128>}, {pipeline_mode = #tpu.pipeline_mode<synchronous>, transform_indices = @transform_11, window_bounds = array<i64: 8, 128>}]} {
    %c0_i32 = arith.constant 0 : i32
    %0 = arith.cmpi eq, %arg0, %c0_i32 : i32
    %1 = arith.extui %0 : i1 to i32
    %c0_i32_0 = arith.constant 0 : i32
    %2 = arith.cmpi ne, %1, %c0_i32_0 : i32
    scf.if %2 {
      %c0_23 = arith.constant 0 : index
      %c0_24 = arith.constant 0 : index
      %33 = vector.load %arg2[%c0_23, %c0_24] : memref<128x128xf32, #tpu.memory_space<vmem>>, vector<128x128xf32>
      %c0_25 = arith.constant 0 : index
      %c0_26 = arith.constant 0 : index
      %34 = vector.load %arg13[%c0_25, %c0_26] : memref<128x128xf32, #tpu.memory_space<vmem>>, vector<128x128xf32>
      tpu.vector_store %arg13[%c0_25, %c0_26], %33 {strides = array<i32>} : memref<128x128xf32, #tpu.memory_space<vmem>>, vector<128x128xf32>,
    } else {
    }
    %c0 = arith.constant 0 : index
    %c0_1 = arith.constant 0 : index
    %3 = vector.load %arg1[%c0, %c0_1] : memref<128x128xbf16, #tpu.memory_space<vmem>>, vector<128x128xbf16>
    %c0_2 = arith.constant 0 : index
    %c0_3 = arith.constant 0 : index
    %4 = vector.load %arg13[%c0_2, %c0_3] : memref<128x128xf32, #tpu.memory_space<vmem>>, vector<128x128xf32>
    %5 = arith.truncf %4 : vector<128x128xf32> to vector<128x128xbf16>
    %cst = arith.constant dense<0.000000e+00> : vector<128x128xf32>
    %6 = tpu.matmul %3, %5, %cst {dimension_numbers = #tpu.dot_dimension_numbers<[1], [0], [0], [1], [0, 0, 1, 1], [], []>} : vector<128x128xbf16>, vector<128x128xbf16>, vector<128x128xf32> -> vector<128x128xf32>
    %c0_4 = arith.constant 0 : index
    %c0_5 = arith.constant 0 : index
    %7 = vector.load %arg3[%c0_4, %c0_5] : memref<128x128xf32, #tpu.memory_space<vmem>>, vector<128x128xf32>
    %8 = arith.addf %6, %7 : vector<128x128xf32>
    %9 = arith.truncf %8 : vector<128x128xf32> to vector<128x128xbf16>
    %c0_6 = arith.constant 0 : index
    %c0_7 = arith.constant 0 : index
    %c0_8 = arith.constant 0 : index
    %10 = vector.load %arg4[%c0_6, %c0_7, %c0_8] : memref<1x128x128xbf16, #tpu.memory_space<vmem>>, vector<1x128x128xbf16>
    %11 = vector.shape_cast %10 : vector<1x128x128xbf16> to vector<128x128xbf16>
    %cst_9 = arith.constant dense<0.000000e+00> : vector<128x128xf32>
    %12 = tpu.matmul %9, %11, %cst_9 {dimension_numbers = #tpu.dot_dimension_numbers<[1], [0], [0], [1], [0, 0, 1, 1], [], []>} : vector<128x128xbf16>, vector<128x128xbf16>, vector<128x128xf32> -> vector<128x128xf32>
    %c0_10 = arith.constant 0 : index
    %c0_11 = arith.constant 0 : index
    %c0_12 = arith.constant 0 : index
    %13 = vector.load %arg5[%c0_10, %c0_11, %c0_12] : memref<1x1x128xf32, #tpu.memory_space<vmem>>, vector<1x1x128xf32>
    %14 = vector.shape_cast %13 : vector<1x1x128xf32> to vector<1x128xf32>
    %15 = vector.broadcast %14 : vector<1x128xf32> to vector<128x128xf32>
    %16 = arith.addf %12, %15 : vector<128x128xf32>
    %cst_13 = arith.constant 0.000000e+00 : f32
    %17 = vector.broadcast %cst_13 : f32 to vector<128x128xf32>
    %18 = arith.maximumf %16, %17 : vector<128x128xf32>
    %19 = arith.truncf %18 : vector<128x128xf32> to vector<128x128xbf16>
    %c0_14 = arith.constant 0 : index
    %c0_15 = arith.constant 0 : index
    %c0_16 = arith.constant 0 : index
    %20 = vector.load %arg6[%c0_14, %c0_15, %c0_16] : memref<1x128x128xbf16, #tpu.memory_space<vmem>>, vector<1x128x128xbf16>
    %21 = vector.shape_cast %20 : vector<1x128x128xbf16> to vector<128x128xbf16>
    %cst_17 = arith.constant dense<0.000000e+00> : vector<128x128xf32>
    %22 = tpu.matmul %19, %21, %cst_17 {dimension_numbers = #tpu.dot_dimension_numbers<[1], [0], [0], [1], [0, 0, 1, 1], [], []>} : vector<128x128xbf16>, vector<128x128xbf16>, vector<128x128xf32> -> vector<128x128xf32>
    %c0_18 = arith.constant 0 : index
    %c0_19 = arith.constant 0 : index
    %c0_20 = arith.constant 0 : index
    %23 = vector.load %arg7[%c0_18, %c0_19, %c0_20] : memref<1x1x128xf32, #tpu.memory_space<vmem>>, vector<1x1x128xf32>
    %24 = vector.shape_cast %23 : vector<1x1x128xf32> to vector<1x128xf32>
    %25 = vector.broadcast %24 : vector<1x128xf32> to vector<128x128xf32>
    %26 = arith.addf %22, %25 : vector<128x128xf32>
    %c2_i32 = arith.constant 2 : i32
    %27 = arith.cmpi eq, %arg0, %c2_i32 : i32
    %true = arith.constant true
    %28 = arith.xori %27, %true : i1
    %29 = arith.extui %28 : i1 to i32
    %c0_i32_21 = arith.constant 0 : i32
    %30 = arith.cmpi ne, %29, %c0_i32_21 : i32
    scf.if %30 {
      %cst_23 = arith.constant 0.000000e+00 : f32
      %33 = vector.broadcast %cst_23 : f32 to vector<128x128xf32>
      %34 = arith.maximumf %26, %33 : vector<128x128xf32>
      %c0_24 = arith.constant 0 : index
      %c0_25 = arith.constant 0 : index
      %35 = vector.load %arg13[%c0_24, %c0_25] : memref<128x128xf32, #tpu.memory_space<vmem>>, vector<128x128xf32>
      tpu.vector_store %arg13[%c0_24, %c0_25], %34 {strides = array<i32>} : memref<128x128xf32, #tpu.memory_space<vmem>>, vector<128x128xf32>,
    } else {
    }
    %31 = arith.extui %27 : i1 to i32
    %c0_i32_22 = arith.constant 0 : i32
    %32 = arith.cmpi ne, %31, %c0_i32_22 : i32
    scf.if %32 {
      %c0_23 = arith.constant 0 : index
      %c0_24 = arith.constant 0 : index
      %33 = vector.load %arg8[%c0_23, %c0_24] : memref<8x128xbf16, #tpu.memory_space<vmem>>, vector<8x128xbf16>
      %34 = arith.truncf %26 : vector<128x128xf32> to vector<128x128xbf16>
      %cst_25 = arith.constant dense<0.000000e+00> : vector<8x128xf32>
      %35 = tpu.matmul %33, %34, %cst_25 {dimension_numbers = #tpu.dot_dimension_numbers<[1], [0], [0], [1], [0, 0, 1, 1], [], []>} : vector<8x128xbf16>, vector<128x128xbf16>, vector<8x128xf32> -> vector<8x128xf32>
      %c0_26 = arith.constant 0 : index
      %c0_27 = arith.constant 0 : index
      %36 = vector.load %arg11[%c0_26, %c0_27] : memref<8x128xf32, #tpu.memory_space<vmem>>, vector<8x128xf32>
      tpu.vector_store %arg11[%c0_26, %c0_27], %35 {strides = array<i32>} : memref<8x128xf32, #tpu.memory_space<vmem>>, vector<8x128xf32>,
      %37 = arith.truncf %35 : vector<8x128xf32> to vector<8x128xbf16>
      %c0_28 = arith.constant 0 : index
      %c0_29 = arith.constant 0 : index
      %38 = vector.load %arg9[%c0_28, %c0_29] : memref<128x128xbf16, #tpu.memory_space<vmem>>, vector<128x128xbf16>
      %cst_30 = arith.constant dense<0.000000e+00> : vector<8x128xf32>
      %39 = tpu.matmul %37, %38, %cst_30 {dimension_numbers = #tpu.dot_dimension_numbers<[1], [0], [0], [1], [0, 0, 1, 1], [], []>} : vector<8x128xbf16>, vector<128x128xbf16>, vector<8x128xf32> -> vector<8x128xf32>
      %c0_31 = arith.constant 0 : index
      %c0_32 = arith.constant 0 : index
      %40 = vector.load %arg10[%c0_31, %c0_32] : memref<1x128xf32, #tpu.memory_space<vmem>>, vector<1x128xf32>
      %41 = vector.broadcast %40 : vector<1x128xf32> to vector<8x128xf32>
      %42 = arith.addf %39, %41 : vector<8x128xf32>
      %c0_33 = arith.constant 0 : index
      %c0_34 = arith.constant 0 : index
      %43 = vector.load %arg12[%c0_33, %c0_34] : memref<8x128xf32, #tpu.memory_space<vmem>>, vector<8x128xf32>
      tpu.vector_store %arg12[%c0_33, %c0_34], %42 {strides = array<i32>} : memref<8x128xf32, #tpu.memory_space<vmem>>, vector<8x128xf32>,
    } else {
    }
    return
  }
  func.func @transform_0(%arg0: i32) -> (i32, i32) {
    %c0_i32 = arith.constant 0 : i32
    %c0_i32_0 = arith.constant 0 : i32
    %c0_i32_1 = arith.constant 0 : i32
    return %c0_i32, %c0_i32_0 : i32, i32
  }
  func.func @transform_1(%arg0: i32) -> (i32, i32) {
    %c0_i32 = arith.constant 0 : i32
    %c0_i32_0 = arith.constant 0 : i32
    %c0_i32_1 = arith.constant 0 : i32
    return %c0_i32, %c0_i32_0 : i32, i32
  }
  func.func @transform_2(%arg0: i32) -> (i32, i32) {
    %c0_i32 = arith.constant 0 : i32
    %c0_i32_0 = arith.constant 0 : i32
    %c0_i32_1 = arith.constant 0 : i32
    return %c0_i32, %c0_i32_0 : i32, i32
  }
  func.func @transform_3(%arg0: i32) -> (i32, i32, i32) {
    %c0_i32 = arith.constant 0 : i32
    %c0_i32_0 = arith.constant 0 : i32
    %c0_i32_1 = arith.constant 0 : i32
    return %arg0, %c0_i32, %c0_i32_0 : i32, i32, i32
  }
  func.func @transform_4(%arg0: i32) -> (i32, i32, i32) {
    %c0_i32 = arith.constant 0 : i32
    %c0_i32_0 = arith.constant 0 : i32
    %c0_i32_1 = arith.constant 0 : i32
    return %arg0, %c0_i32, %c0_i32_0 : i32, i32, i32
  }
  func.func @transform_5(%arg0: i32) -> (i32, i32, i32) {
    %c0_i32 = arith.constant 0 : i32
    %c0_i32_0 = arith.constant 0 : i32
    %c0_i32_1 = arith.constant 0 : i32
    return %arg0, %c0_i32, %c0_i32_0 : i32, i32, i32
  }
  func.func @transform_6(%arg0: i32) -> (i32, i32, i32) {
    %c0_i32 = arith.constant 0 : i32
    %c0_i32_0 = arith.constant 0 : i32
    %c0_i32_1 = arith.constant 0 : i32
    return %arg0, %c0_i32, %c0_i32_0 : i32, i32, i32
  }
  func.func @transform_7(%arg0: i32) -> (i32, i32) {
    %c0_i32 = arith.constant 0 : i32
    %c0_i32_0 = arith.constant 0 : i32
    %c0_i32_1 = arith.constant 0 : i32
    return %c0_i32, %c0_i32_0 : i32, i32
  }
  func.func @transform_8(%arg0: i32) -> (i32, i32) {
    %c0_i32 = arith.constant 0 : i32
    %c0_i32_0 = arith.constant 0 : i32
    %c0_i32_1 = arith.constant 0 : i32
    return %c0_i32, %c0_i32_0 : i32, i32
  }
  func.func @transform_9(%arg0: i32) -> (i32, i32) {
    %c0_i32 = arith.constant 0 : i32
    %c0_i32_0 = arith.constant 0 : i32
    %c0_i32_1 = arith.constant 0 : i32
    return %c0_i32, %c0_i32_0 : i32, i32
  }
  func.func @transform_10(%arg0: i32) -> (i32, i32) {
    %c0_i32 = arith.constant 0 : i32
    %c0_i32_0 = arith.constant 0 : i32
    %c0_i32_1 = arith.constant 0 : i32
    return %c0_i32, %c0_i32_0 : i32, i32
  }
  func.func @transform_11(%arg0: i32) -> (i32, i32) {
    %c0_i32 = arith.constant 0 : i32
    %c0_i32_0 = arith.constant 0 : i32
    %c0_i32_1 = arith.constant 0 : i32
    return %c0_i32, %c0_i32_0 : i32, i32
  }
}

</mosaic_0001>

<llo_original>
// kernel: tpu_custom_call.1
$region0: #{tpu_custom_call.1}
  #allocation0 [shape = 'u32[]', space=smem, size = 0x4, offset = 0x4, fixed_abs, tag = 'smem constant byte address 0x4 - core index']
  #allocation1 [shape = 'u32[144,128]{1,0:T(1,128)}', space=vmem, size = 0x12000, scoped, tag = 'internal scratch']
  #allocation2 [shape = 'f32[128,128]{1,0:T(8,128)}', space=vmem, size = 0x10000, scoped, tag = 'scratch operand']
  %s0 = inlined_call_operand.hbm [shape: bf16[128,128], index: 0, kind: input, shape index: {}]
  %s1 = inlined_call_operand.hbm [shape: f32[128,128], index: 1, kind: input, shape index: {}]
  %s2 = inlined_call_operand.hbm [shape: f32[128,128], index: 2, kind: input, shape index: {}]
  %s3 = inlined_call_operand.hbm [shape: bf16[3,128,128], index: 3, kind: input, shape index: {}]
  %s4 = inlined_call_operand.vmem [shape: f32[3,1,128], index: 4, kind: input, shape index: {}]
  %s5 = inlined_call_operand.hbm [shape: bf16[3,128,128], index: 5, kind: input, shape index: {}]
  %s6 = inlined_call_operand.vmem [shape: f32[3,1,128], index: 6, kind: input, shape index: {}]
  %s7 = inlined_call_operand.vmem [shape: bf16[8,128], index: 7, kind: input, shape index: {}]
  %s8 = inlined_call_operand.hbm [shape: bf16[128,128], index: 8, kind: input, shape index: {}]
  %s9 = inlined_call_operand.vmem [shape: f32[1,128], index: 9, kind: input, shape index: {}]
  %s10 = inlined_call_operand.hbm [shape: f32[8,128], index: 10, kind: output, shape index: {0}]
  %s11 = inlined_call_operand.hbm [shape: f32[8,128], index: 11, kind: output, shape index: {1}]
  %12 = xla_tuple %s10, %s11
  %s13 = sld [smem:[#allocation0]]
  $region117: #{tpu_custom_call.1} parent=0
    _
  %s15 = ssub.s32 1, %s13
  %s16 = scalar_select 0, %s15, %s13
  $region1: #{tpu_custom_call.1} parent=0
    #allocation3 [shape = 'u8[32768]{0}', space=vmem, size = 0x8000, scoped, tag = 'input window, operand 0, single buffered']
    #allocation4 [shape = 's32[2]{0}', space=sflag, size = 0x8, scoped, tag = 'scoped memory for tpu_custom_call.1']
    #allocation5 [shape = 's32[2]{0}', space=sflag, size = 0x8, scoped, tag = 'scoped memory for tpu_custom_call.1']
    #allocation6 [shape = 'u8[65536]{0}', space=vmem, size = 0x10000, scoped, tag = 'input window, operand 1, single buffered']
    #allocation7 [shape = 's32[1]{0}', space=sflag, size = 0x4, scoped, tag = 'scoped memory for tpu_custom_call.1']
    #allocation8 [shape = 'u8[65536]{0}', space=vmem, size = 0x10000, scoped, tag = 'input window, operand 2, single buffered']
    #allocation9 [shape = 'u8[65536]{0}', space=vmem, size = 0x10000, scoped, tag = 'input window, operand 3']
    #allocation10 [shape = 's32[2]{0}', space=sflag, size = 0x8, scoped, tag = 'scoped memory for tpu_custom_call.1']
    #allocation11 [shape = 'u8[65536]{0}', space=vmem, size = 0x10000, scoped, tag = 'input window, operand 5']
    #allocation12 [shape = 'u8[32768]{0}', space=vmem, size = 0x8000, scoped, tag = 'input window, operand 8, single buffered']
    #allocation13 [shape = 's32[1]{0}', space=sflag, size = 0x4, scoped, tag = 'scoped memory for tpu_custom_call.1']
    #allocation14 [shape = 'u8[4096]{0}', space=vmem, size = 0x1000, scoped, tag = 'output window, operand 0, single buffered']
    #allocation15 [shape = 'u8[4096]{0}', space=vmem, size = 0x1000, scoped, tag = 'output window, operand 1, single buffered']
    #allocation16 [shape = 's32[1]{0}', space=sflag, size = 0x4, scoped, tag = 'scoped memory for tpu_custom_call.1']
    %17 = vsyncpa [#allocation4], 0
    %18 = vsyncpa [#allocation7], 0
    %19 = vsyncpa [#allocation10], 0
    %s20 = scalar_lea.sflag [#allocation10], 1
    %21 = vsyncpa %s20, 0
    %22 = vsyncpa [#allocation13], 0
    %23 = vsyncpa [#allocation5], 0
    %24 = vsyncpa [#allocation16], 0
    loop: start=0, step=1, limit=5
    $region2: #{tpu_custom_call.1} parent=1 // loop_pre_header
      _
    $region3: #{tpu_custom_call.1} parent=1 // loop_header
      %s26 = sphi 0, %s30
      %p27 = scmp.ge.s32.totalorder %s26, 5
      %s34 = sphi 0, %s34
      %s36 = sphi 0, %s34
      %s37 = sphi 0, %s36
      %s51 = sphi 0, %s37
      %s55 = sphi 0, %s55
      %s57 = sphi 0, %s55
      %s58 = sphi 0, %s57
      %s72 = sphi 0, %s58
      %s76 = sphi 0, %s76
      %s78 = sphi 0, %s76
      %s79 = sphi 0, %s78
      %s93 = sphi 0, %s79
      %s99 = sphi 0, %s101
      %s102 = sphi 0, %s99
      %s103 = sphi 0, %s102
      %s119 = sphi 0, %s103
      %s125 = sphi 0, %s127
      %s128 = sphi 0, %s125
      %s129 = sphi 0, %s128
      %s145 = sphi 0, %s129
      %s151 = sphi 0, %s153
      %s154 = sphi 0, %s151
      %s155 = sphi 0, %s154
      %s171 = sphi 0, %s155
      %s177 = sphi 0, %s179
      %s180 = sphi 0, %s177
      %s181 = sphi 0, %s180
      %s197 = sphi 0, %s181
      %s201 = sphi 0, %s201
      %s203 = sphi 0, %s201
      %s204 = sphi 0, %s203
      %s218 = sphi 0, %s204
      %s222 = sphi 0, %s222
      %s224 = sphi 0, %s222
      %s225 = sphi 0, %s224
      %s239 = sphi 0, %s225
      %s243 = sphi 0, %s243
      %s245 = sphi 0, %s243
      %s246 = sphi 0, %s245
      %s260 = sphi 0, %s246
      %s264 = sphi 0, %s264
      %s266 = sphi 0, %s264
      %s267 = sphi 0, %s266
      %s281 = sphi 0, %s267
      %s285 = sphi 0, %s285
      %s287 = sphi 0, %s285
      %s288 = sphi 0, %s287
      %s302 = sphi 0, %s288
    $region4: #{tpu_custom_call.1} parent=1 // loop_header_branch
      %29 = sbr.rel (%p27) target = $region8
    $region5: #{tpu_custom_call.1} parent=1 // loop_body
      %s31 = ssub.s32 %s26, 1
      %s32 = ssub.s32 %s26, 2
      %s33 = sadd.s32 %s26, 1
      %s35 = sadd.s32 %s34, 1
      %p38 = scmp.eq.s32.totalorder %s26, 2
      %p39 = scmp.ne.s32.totalorder %s34, %s36
      %p40 = scmp.eq.s32.totalorder %s26, 0
      %p41 = por %p39, %p40
      %p42 = scmp.ne.s32.totalorder %s34, %s36
      %p43 = scmp.eq.s32.totalorder %s31, 2
      %p44 = por %p42, %p43
      %p45 = scmp.ne.s32.totalorder %s36, %s37
      %p46 = scmp.eq.s32.totalorder %s31, 0
      %p47 = por %p45, %p46
      %p48 = scmp.ne.s32.totalorder %s36, %s37
      %p49 = scmp.eq.s32.totalorder %s32, 2
      %p50 = por %p48, %p49
      %p52 = scmp.ne.s32.totalorder %s37, %s51
      %p53 = scmp.eq.s32.totalorder %s32, 0
      %p54 = por %p52, %p53
      %s56 = sadd.s32 %s55, 1
      %p59 = scmp.eq.s32.totalorder %s26, 2
      %p60 = scmp.ne.s32.totalorder %s55, %s57
      %p61 = scmp.eq.s32.totalorder %s26, 0
      %p62 = por %p60, %p61
      %p63 = scmp.ne.s32.totalorder %s55, %s57
      %p64 = scmp.eq.s32.totalorder %s31, 2
      %p65 = por %p63, %p64
      %p66 = scmp.ne.s32.totalorder %s57, %s58
      %p67 = scmp.eq.s32.totalorder %s31, 0
      %p68 = por %p66, %p67
      %p69 = scmp.ne.s32.totalorder %s57, %s58
      %p70 = scmp.eq.s32.totalorder %s32, 2
      %p71 = por %p69, %p70
      %p73 = scmp.ne.s32.totalorder %s58, %s72
      %p74 = scmp.eq.s32.totalorder %s32, 0
      %p75 = por %p73, %p74
      %s77 = sadd.s32 %s76, 1
      %p80 = scmp.eq.s32.totalorder %s26, 2
      %p81 = scmp.ne.s32.totalorder %s76, %s78
      %p82 = scmp.eq.s32.totalorder %s26, 0
      %p83 = por %p81, %p82
      %p84 = scmp.ne.s32.totalorder %s76, %s78
      %p85 = scmp.eq.s32.totalorder %s31, 2
      %p86 = por %p84, %p85
      %p87 = scmp.ne.s32.totalorder %s78, %s79
      %p88 = scmp.eq.s32.totalorder %s31, 0
      %p89 = por %p87, %p88
      %p90 = scmp.ne.s32.totalorder %s78, %s79
      %p91 = scmp.eq.s32.totalorder %s32, 2
      %p92 = por %p90, %p91
      %p94 = scmp.ne.s32.totalorder %s79, %s93
      %p95 = scmp.eq.s32.totalorder %s32, 0
      %p96 = por %p94, %p95
      %s97 = ssub.s32 %s26, %s33
      %p98 = scmp.eq.s32.totalorder %s97, 0
      %s100 = sadd.s32 %s99, 1
      %s101 = scalar_select %p98, %s99, %s100
      %p104 = pneg %p98
      %p105 = scmp.eq.s32.totalorder %s26, 2
      %p106 = por %p104, %p105
      %p107 = scmp.ne.s32.totalorder %s99, %s102
      %p108 = scmp.eq.s32.totalorder %s26, 0
      %p109 = por %p107, %p108
      %p110 = scmp.ne.s32.totalorder %s99, %s102
      %p111 = scmp.eq.s32.totalorder %s31, 2
      %p112 = por %p110, %p111
      %p113 = scmp.ne.s32.totalorder %s102, %s103
      %p114 = scmp.eq.s32.totalorder %s31, 0
      %p115 = por %p113, %p114
      %p116 = scmp.ne.s32.totalorder %s102, %s103
      %p117 = scmp.eq.s32.totalorder %s32, 2
      %p118 = por %p116, %p117
      %p120 = scmp.ne.s32.totalorder %s103, %s119
      %p121 = scmp.eq.s32.totalorder %s32, 0
      %p122 = por %p120, %p121
      %s123 = ssub.s32 %s26, %s33
      %p124 = scmp.eq.s32.totalorder %s123, 0
      %s126 = sadd.s32 %s125, 1
      %s127 = scalar_select %p124, %s125, %s126
      %p130 = pneg %p124
      %p131 = scmp.eq.s32.totalorder %s26, 2
      %p132 = por %p130, %p131
      %p133 = scmp.ne.s32.totalorder %s125, %s128
      %p134 = scmp.eq.s32.totalorder %s26, 0
      %p135 = por %p133, %p134
      %p136 = scmp.ne.s32.totalorder %s125, %s128
      %p137 = scmp.eq.s32.totalorder %s31, 2
      %p138 = por %p136, %p137
      %p139 = scmp.ne.s32.totalorder %s128, %s129
      %p140 = scmp.eq.s32.totalorder %s31, 0
      %p141 = por %p139, %p140
      %p142 = scmp.ne.s32.totalorder %s128, %s129
      %p143 = scmp.eq.s32.totalorder %s32, 2
      %p144 = por %p142, %p143
      %p146 = scmp.ne.s32.totalorder %s129, %s145
      %p147 = scmp.eq.s32.totalorder %s32, 0
      %p148 = por %p146, %p147
      %s149 = ssub.s32 %s26, %s33
      %p150 = scmp.eq.s32.totalorder %s149, 0
      %s152 = sadd.s32 %s151, 1
      %s153 = scalar_select %p150, %s151, %s152
      %p156 = pneg %p150
      %p157 = scmp.eq.s32.totalorder %s26, 2
      %p158 = por %p156, %p157
      %p159 = scmp.ne.s32.totalorder %s151, %s154
      %p160 = scmp.eq.s32.totalorder %s26, 0
      %p161 = por %p159, %p160
      %p162 = scmp.ne.s32.totalorder %s151, %s154
      %p163 = scmp.eq.s32.totalorder %s31, 2
      %p164 = por %p162, %p163
      %p165 = scmp.ne.s32.totalorder %s154, %s155
      %p166 = scmp.eq.s32.totalorder %s31, 0
      %p167 = por %p165, %p166
      %p168 = scmp.ne.s32.totalorder %s154, %s155
      %p169 = scmp.eq.s32.totalorder %s32, 2
      %p170 = por %p168, %p169
      %p172 = scmp.ne.s32.totalorder %s155, %s171
      %p173 = scmp.eq.s32.totalorder %s32, 0
      %p174 = por %p172, %p173
      %s175 = ssub.s32 %s26, %s33
      %p176 = scmp.eq.s32.totalorder %s175, 0
      %s178 = sadd.s32 %s177, 1
      %s179 = scalar_select %p176, %s177, %s178
      %p182 = pneg %p176
      %p183 = scmp.eq.s32.totalorder %s26, 2
      %p184 = por %p182, %p183
      %p185 = scmp.ne.s32.totalorder %s177, %s180
      %p186 = scmp.eq.s32.totalorder %s26, 0
      %p187 = por %p185, %p186
      %p188 = scmp.ne.s32.totalorder %s177, %s180
      %p189 = scmp.eq.s32.totalorder %s31, 2
      %p190 = por %p188, %p189
      %p191 = scmp.ne.s32.totalorder %s180, %s181
      %p192 = scmp.eq.s32.totalorder %s31, 0
      %p193 = por %p191, %p192
      %p194 = scmp.ne.s32.totalorder %s180, %s181
      %p195 = scmp.eq.s32.totalorder %s32, 2
      %p196 = por %p194, %p195
      %p198 = scmp.ne.s32.totalorder %s181, %s197
      %p199 = scmp.eq.s32.totalorder %s32, 0
      %p200 = por %p198, %p199
      %s202 = sadd.s32 %s201, 1
      %p205 = scmp.eq.s32.totalorder %s26, 2
      %p206 = scmp.ne.s32.totalorder %s201, %s203
      %p207 = scmp.eq.s32.totalorder %s26, 0
      %p208 = por %p206, %p207
      %p209 = scmp.ne.s32.totalorder %s201, %s203
      %p210 = scmp.eq.s32.totalorder %s31, 2
      %p211 = por %p209, %p210
      %p212 = scmp.ne.s32.totalorder %s203, %s204
      %p213 = scmp.eq.s32.totalorder %s31, 0
      %p214 = por %p212, %p213
      %p215 = scmp.ne.s32.totalorder %s203, %s204
      %p216 = scmp.eq.s32.totalorder %s32, 2
      %p217 = por %p215, %p216
      %p219 = scmp.ne.s32.totalorder %s204, %s218
      %p220 = scmp.eq.s32.totalorder %s32, 0
      %p221 = por %p219, %p220
      %s223 = sadd.s32 %s222, 1
      %p226 = scmp.eq.s32.totalorder %s26, 2
      %p227 = scmp.ne.s32.totalorder %s222, %s224
      %p228 = scmp.eq.s32.totalorder %s26, 0
      %p229 = por %p227, %p228
      %p230 = scmp.ne.s32.totalorder %s222, %s224
      %p231 = scmp.eq.s32.totalorder %s31, 2
      %p232 = por %p230, %p231
      %p233 = scmp.ne.s32.totalorder %s224, %s225
      %p234 = scmp.eq.s32.totalorder %s31, 0
      %p235 = por %p233, %p234
      %p236 = scmp.ne.s32.totalorder %s224, %s225
      %p237 = scmp.eq.s32.totalorder %s32, 2
      %p238 = por %p236, %p237
      %p240 = scmp.ne.s32.totalorder %s225, %s239
      %p241 = scmp.eq.s32.totalorder %s32, 0
      %p242 = por %p240, %p241
      %s244 = sadd.s32 %s243, 1
      %p247 = scmp.eq.s32.totalorder %s26, 2
      %p248 = scmp.ne.s32.totalorder %s243, %s245
      %p249 = scmp.eq.s32.totalorder %s26, 0
      %p250 = por %p248, %p249
      %p251 = scmp.ne.s32.totalorder %s243, %s245
      %p252 = scmp.eq.s32.totalorder %s31, 2
      %p253 = por %p251, %p252
      %p254 = scmp.ne.s32.totalorder %s245, %s246
      %p255 = scmp.eq.s32.totalorder %s31, 0
      %p256 = por %p254, %p255
      %p257 = scmp.ne.s32.totalorder %s245, %s246
      %p258 = scmp.eq.s32.totalorder %s32, 2
      %p259 = por %p257, %p258
      %p261 = scmp.ne.s32.totalorder %s246, %s260
      %p262 = scmp.eq.s32.totalorder %s32, 0
      %p263 = por %p261, %p262
      %s265 = sadd.s32 %s264, 1
      %p268 = scmp.eq.s32.totalorder %s26, 2
      %p269 = scmp.ne.s32.totalorder %s264, %s266
      %p270 = scmp.eq.s32.totalorder %s26, 0
      %p271 = por %p269, %p270
      %p272 = scmp.ne.s32.totalorder %s264, %s266
      %p273 = scmp.eq.s32.totalorder %s31, 2
      %p274 = por %p272, %p273
      %p275 = scmp.ne.s32.totalorder %s266, %s267
      %p276 = scmp.eq.s32.totalorder %s31, 0
      %p277 = por %p275, %p276
      %p278 = scmp.ne.s32.totalorder %s266, %s267
      %p279 = scmp.eq.s32.totalorder %s32, 2
      %p280 = por %p278, %p279
      %p282 = scmp.ne.s32.totalorder %s267, %s281
      %p283 = scmp.eq.s32.totalorder %s32, 0
      %p284 = por %p282, %p283
      %s286 = sadd.s32 %s285, 1
      %p289 = scmp.eq.s32.totalorder %s26, 2
      %p290 = scmp.ne.s32.totalorder %s285, %s287
      %p291 = scmp.eq.s32.totalorder %s26, 0
      %p292 = por %p290, %p291
      %p293 = scmp.ne.s32.totalorder %s285, %s287
      %p294 = scmp.eq.s32.totalorder %s31, 2
      %p295 = por %p293, %p294
      %p296 = scmp.ne.s32.totalorder %s287, %s288
      %p297 = scmp.eq.s32.totalorder %s31, 0
      %p298 = por %p296, %p297
      %p299 = scmp.ne.s32.totalorder %s287, %s288
      %p300 = scmp.eq.s32.totalorder %s32, 2
      %p301 = por %p299, %p300
      %p303 = scmp.ne.s32.totalorder %s288, %s302
      %p304 = scmp.eq.s32.totalorder %s32, 0
      %p305 = por %p303, %p304
      %p306 = scmp.le.s32.totalorder 1, %s26
      %p307 = scmp.lt.s32.totalorder %s26, 4
      %p308 = pnand %p306, %p307
      %p309 = pneg %p308
      // Predicated region
      $region9: #{tpu_custom_call.1} parent=5 // pred_check
        _
      $region10: #{tpu_custom_call.1} parent=5 // pred_check_branch
        %311 = sbr.rel (%p308) target = $region12
      $region11: #{tpu_custom_call.1} parent=5 // pred_region
        %s312 = ssub.s32 %s26, 1
        // Predicated region
        $region13: #{tpu_custom_call.1} parent=11 // pred_check
          %p313 = pneg %p47
        $region14: #{tpu_custom_call.1} parent=11 // pred_check_branch
          %315 = sbr.rel (%p313) target = $region16
        $region15: #{tpu_custom_call.1} parent=11 // pred_region
          %s317 = ssub.s32 1024, 1024
          %318 = vsyncadd [#allocation4], %s317
          %s319 = sshll.u32 [#allocation3], 4
          %s320 = int_to_ptr.vmem [resolvable:$true] %s319
          %325 = dma.hbm_to_vmem [thread:$0]  %s0, 1024, %s320, [#allocation4], 64, 64, 4
        $region16: #{tpu_custom_call.1} parent=11 // pred_fallthru
          _
        // Predicated region
        $region17: #{tpu_custom_call.1} parent=11 // pred_check
          %p326 = pneg %p68
        $region18: #{tpu_custom_call.1} parent=11 // pred_check_branch
          %328 = sbr.rel (%p326) target = $region20
        $region19: #{tpu_custom_call.1} parent=11 // pred_region
          %s330 = ssub.s32 2048, 2048
          %331 = vsyncadd [#allocation7], %s330
          %s332 = sshll.u32 [#allocation6], 4
          %s333 = int_to_ptr.vmem [resolvable:$true] %s332
          %338 = dma.hbm_to_vmem [thread:$0]  %s1, 2048, %s333, [#allocation7], 128, 128, 8
        $region20: #{tpu_custom_call.1} parent=11 // pred_fallthru
          _
        // Predicated region
        $region21: #{tpu_custom_call.1} parent=11 // pred_check
          %p339 = pneg %p89
        $region22: #{tpu_custom_call.1} parent=11 // pred_check_branch
          %341 = sbr.rel (%p339) target = $region24
        $region23: #{tpu_custom_call.1} parent=11 // pred_region
          %s343 = ssub.s32 2048, 2048
          %344 = vsyncadd [#allocation7], %s343
          %s345 = sshll.u32 [#allocation8], 4
          %s346 = int_to_ptr.vmem [resolvable:$true] %s345
          %351 = dma.hbm_to_vmem [thread:$0]  %s2, 2048, %s346, [#allocation7], 128, 128, 8
        $region24: #{tpu_custom_call.1} parent=11 // pred_fallthru
          _
        // Predicated region
        $region25: #{tpu_custom_call.1} parent=11 // pred_check
          %p352 = pneg %p214
        $region26: #{tpu_custom_call.1} parent=11 // pred_check_branch
          %354 = sbr.rel (%p352) target = $region28
        $region27: #{tpu_custom_call.1} parent=11 // pred_region
          _
        $region28: #{tpu_custom_call.1} parent=11 // pred_fallthru
          _
        // Predicated region
        $region29: #{tpu_custom_call.1} parent=11 // pred_check
          %p355 = pneg %p235
        $region30: #{tpu_custom_call.1} parent=11 // pred_check_branch
          %357 = sbr.rel (%p355) target = $region32
        $region31: #{tpu_custom_call.1} parent=11 // pred_region
          %s359 = ssub.s32 1024, 1024
          %360 = vsyncadd [#allocation13], %s359
          %s361 = sshll.u32 [#allocation12], 4
          %s362 = int_to_ptr.vmem [resolvable:$true] %s361
          %367 = dma.hbm_to_vmem [thread:$0]  %s8, 1024, %s362, [#allocation13], 64, 64, 4
        $region32: #{tpu_custom_call.1} parent=11 // pred_fallthru
          _
        // Predicated region
        $region33: #{tpu_custom_call.1} parent=11 // pred_check
          %p368 = pneg %p256
        $region34: #{tpu_custom_call.1} parent=11 // pred_check_branch
          %370 = sbr.rel (%p368) target = $region36
        $region35: #{tpu_custom_call.1} parent=11 // pred_region
          _
        $region36: #{tpu_custom_call.1} parent=11 // pred_fallthru
          _
      $region12: #{tpu_custom_call.1} parent=5 // pred_fallthru
        _
      %p371 = scmp.lt.s32.totalorder %s26, 3
      // Predicated region
      $region37: #{tpu_custom_call.1} parent=5 // pred_check
        %p372 = pneg %p371
      $region38: #{tpu_custom_call.1} parent=5 // pred_check_branch
        %374 = sbr.rel (%p372) target = $region40
      $region39: #{tpu_custom_call.1} parent=5 // pred_region
        // Predicated region
        $region41: #{tpu_custom_call.1} parent=39 // pred_check
          %p375 = pneg %p109
        $region42: #{tpu_custom_call.1} parent=39 // pred_check_branch
          %377 = sbr.rel (%p375) target = $region44
        $region43: #{tpu_custom_call.1} parent=39 // pred_region
          %s378 = sand.u32 %s26, 1
          %s379 = scalar_lea.sflag [#allocation10], %s378
          %s380 = sand.u32 %s99, 1
          %s381 = smul.addr %s380, 64
          %s382 = scalar_lea.vmem [#allocation9], %s381
          %s384 = ssub.s32 1024, 1024
          %385 = vsyncadd %s379, %s384
          %s386 = smul.addr %s26, 16
          %s387 = smul.addr %s386, 64
          %s388 = scalar_lea.hbm %s3, %s387
          %s389 = sshll.u32 %s382, 4
          %s390 = int_to_ptr.vmem [resolvable:$true] %s389
          %395 = dma.hbm_to_vmem [thread:$0]  %s388, 1024, %s390, %s379, 64, 64, 4
        $region44: #{tpu_custom_call.1} parent=39 // pred_fallthru
          _
        // Predicated region
        $region45: #{tpu_custom_call.1} parent=39 // pred_check
          %p396 = pneg %p135
        $region46: #{tpu_custom_call.1} parent=39 // pred_check_branch
          %398 = sbr.rel (%p396) target = $region48
        $region47: #{tpu_custom_call.1} parent=39 // pred_region
          %p399 = scmp.lt.s32.totalorder %s26, 2
          %s400 = scalar_select %p399, %s26, 2
          %s401 = scalar_lea.vmem %s4, %s400
        $region48: #{tpu_custom_call.1} parent=39 // pred_fallthru
          _
        // Predicated region
        $region49: #{tpu_custom_call.1} parent=39 // pred_check
          %p402 = pneg %p161
        $region50: #{tpu_custom_call.1} parent=39 // pred_check_branch
          %404 = sbr.rel (%p402) target = $region52
        $region51: #{tpu_custom_call.1} parent=39 // pred_region
          %s405 = sand.u32 %s26, 1
          %s406 = scalar_lea.sflag [#allocation10], %s405
          %s407 = sand.u32 %s151, 1
          %s408 = smul.addr %s407, 64
          %s409 = scalar_lea.vmem [#allocation11], %s408
          %s411 = ssub.s32 1024, 1024
          %412 = vsyncadd %s406, %s411
          %s413 = smul.addr %s26, 16
          %s414 = smul.addr %s413, 64
          %s415 = scalar_lea.hbm %s5, %s414
          %s416 = sshll.u32 %s409, 4
          %s417 = int_to_ptr.vmem [resolvable:$true] %s416
          %422 = dma.hbm_to_vmem [thread:$0]  %s415, 1024, %s417, %s406, 64, 64, 4
        $region52: #{tpu_custom_call.1} parent=39 // pred_fallthru
          _
        // Predicated region
        $region53: #{tpu_custom_call.1} parent=39 // pred_check
          %p423 = pneg %p187
        $region54: #{tpu_custom_call.1} parent=39 // pred_check_branch
          %425 = sbr.rel (%p423) target = $region56
        $region55: #{tpu_custom_call.1} parent=39 // pred_region
          %p426 = scmp.lt.s32.totalorder %s26, 2
          %s427 = scalar_select %p426, %s26, 2
          %s428 = scalar_lea.vmem %s6, %s427
        $region56: #{tpu_custom_call.1} parent=39 // pred_fallthru
          _
      $region40: #{tpu_custom_call.1} parent=5 // pred_fallthru
        _
      %p429 = scmp.le.s32.totalorder 1, %s26
      %p430 = scmp.lt.s32.totalorder %s26, 4
      %p431 = pnand %p429, %p430
      %p432 = pneg %p431
      // Predicated region
      $region57: #{tpu_custom_call.1} parent=5 // pred_check
        _
      $region58: #{tpu_custom_call.1} parent=5 // pred_check_branch
        %434 = sbr.rel (%p431) target = $region60
      $region59: #{tpu_custom_call.1} parent=5 // pred_region
        %s435 = ssub.s32 %s26, 1
        // Predicated region
        $region61: #{tpu_custom_call.1} parent=59 // pred_check
          %p436 = pneg %p47
        $region62: #{tpu_custom_call.1} parent=59 // pred_check_branch
          %438 = sbr.rel (%p436) target = $region64
        $region63: #{tpu_custom_call.1} parent=59 // pred_region
          %439 = dma.done [#allocation4], 1024
        $region64: #{tpu_custom_call.1} parent=59 // pred_fallthru
          _
        // Predicated region
        $region65: #{tpu_custom_call.1} parent=59 // pred_check
          %p440 = pneg %p68
        $region66: #{tpu_custom_call.1} parent=59 // pred_check_branch
          %442 = sbr.rel (%p440) target = $region68
        $region67: #{tpu_custom_call.1} parent=59 // pred_region
          %443 = dma.done [#allocation7], 2048
        $region68: #{tpu_custom_call.1} parent=59 // pred_fallthru
          _
        // Predicated region
        $region69: #{tpu_custom_call.1} parent=59 // pred_check
          %p444 = pneg %p89
        $region70: #{tpu_custom_call.1} parent=59 // pred_check_branch
          %446 = sbr.rel (%p444) target = $region72
        $region71: #{tpu_custom_call.1} parent=59 // pred_region
          %447 = dma.done [#allocation7], 2048
        $region72: #{tpu_custom_call.1} parent=59 // pred_fallthru
          _
        %s448 = sand.u32 %s31, 1
        %s449 = scalar_lea.sflag [#allocation10], %s448
        %s450 = sand.u32 %s102, 1
        %s451 = smul.addr %s450, 64
        %s452 = scalar_lea.vmem [#allocation9], %s451
        // Predicated region
        $region73: #{tpu_custom_call.1} parent=59 // pred_check
          %p453 = pneg %p115
        $region74: #{tpu_custom_call.1} parent=59 // pred_check_branch
          %455 = sbr.rel (%p453) target = $region76
        $region75: #{tpu_custom_call.1} parent=59 // pred_region
          %456 = dma.done %s449, 1024
        $region76: #{tpu_custom_call.1} parent=59 // pred_fallthru
          _
        %s457 = sand.u32 %s31, 1
        %s458 = scalar_lea.sflag [#allocation10], %s457
        %s459 = sand.u32 %s154, 1
        %s460 = smul.addr %s459, 64
        %s461 = scalar_lea.vmem [#allocation11], %s460
        // Predicated region
        $region77: #{tpu_custom_call.1} parent=59 // pred_check
          %p462 = pneg %p167
        $region78: #{tpu_custom_call.1} parent=59 // pred_check_branch
          %464 = sbr.rel (%p462) target = $region80
        $region79: #{tpu_custom_call.1} parent=59 // pred_region
          %465 = dma.done %s458, 1024
        $region80: #{tpu_custom_call.1} parent=59 // pred_fallthru
          _
        // Predicated region
        $region81: #{tpu_custom_call.1} parent=59 // pred_check
          %p466 = pneg %p235
        $region82: #{tpu_custom_call.1} parent=59 // pred_check_branch
          %468 = sbr.rel (%p466) target = $region84
        $region83: #{tpu_custom_call.1} parent=59 // pred_region
          %469 = dma.done [#allocation13], 1024
        $region84: #{tpu_custom_call.1} parent=59 // pred_fallthru
          _
        %p470 = pneg %p47
        %p471 = pneg %p44
        %p472 = pneg %p68
        %p473 = pneg %p65
        %p474 = pneg %p89
        %p475 = pneg %p86
        %s476 = sand.u32 %s31, 1
        %s477 = scalar_lea.sflag [#allocation10], %s476
        %s478 = sand.u32 %s102, 1
        %s479 = smul.addr %s478, 64
        %s480 = scalar_lea.vmem [#allocation9], %s479
        %p481 = pneg %p115
        %p482 = pneg %p112
        %p483 = scmp.lt.s32.totalorder %s31, 2
        %s484 = scalar_select %p483, %s31, 2
        %s485 = scalar_lea.vmem %s4, %s484
        %p486 = pneg %p141
        %p487 = pneg %p138
        %s488 = sand.u32 %s31, 1
        %s489 = scalar_lea.sflag [#allocation10], %s488
        %s490 = sand.u32 %s154, 1
        %s491 = smul.addr %s490, 64
        %s492 = scalar_lea.vmem [#allocation11], %s491
        %p493 = pneg %p167
        %p494 = pneg %p164
        %p495 = scmp.lt.s32.totalorder %s31, 2
        %s496 = scalar_select %p495, %s31, 2
        %s497 = scalar_lea.vmem %s6, %s496
        %p498 = pneg %p193
        %p499 = pneg %p190
        %p500 = pneg %p214
        %p501 = pneg %p211
        %p502 = pneg %p235
        %p503 = pneg %p232
        %p504 = pneg %p256
        %p505 = pneg %p253
        %p506 = pneg %p277
        %p507 = pneg %p274
        %p508 = pneg %p298
        %p509 = pneg %p295
        %p510 = scmp.lt.s32.totalorder %s31, 2
        %s511 = scalar_select %p510, %s31, 2
        %s512 = scalar_lea.vmem %s4, %s511
        %p513 = scmp.lt.s32.totalorder %s31, 2
        %s514 = scalar_select %p513, %s31, 2
        %s515 = scalar_lea.vmem %s6, %s514
        %p517 = scmp.eq.s32.totalorder %s31, 0
        // Predicated region
        $region85: #{tpu_custom_call.1} parent=59 // pred_check
          %p518 = pneg %p517
        $region86: #{tpu_custom_call.1} parent=59 // pred_check_branch
          %520 = sbr.rel (%p518) target = $region88
        $region87: #{tpu_custom_call.1} parent=59 // pred_region
          %v521 = vld [vmem:[#allocation6] sm:$0xff]
          %v522 = vld [vmem:[#allocation6 + $0x8] sm:$0xff]
          %v523 = vld [vmem:[#allocation6 + $0x10] sm:$0xff]
          %v524 = vld [vmem:[#allocation6 + $0x18] sm:$0xff]
          %v525 = vld [vmem:[#allocation6 + $0x20] sm:$0xff]
          %v526 = vld [vmem:[#allocation6 + $0x28] sm:$0xff]
          %v527 = vld [vmem:[#allocation6 + $0x30] sm:$0xff]
          %v528 = vld [vmem:[#allocation6 + $0x38] sm:$0xff]
          %v529 = vld [vmem:[#allocation6 + $0x40] sm:$0xff]
          %v530 = vld [vmem:[#allocation6 + $0x48] sm:$0xff]
          %v531 = vld [vmem:[#allocation6 + $0x50] sm:$0xff]
          %v532 = vld [vmem:[#allocation6 + $0x58] sm:$0xff]
          %v533 = vld [vmem:[#allocation6 + $0x60] sm:$0xff]
          %v534 = vld [vmem:[#allocation6 + $0x68] sm:$0xff]
          %v535 = vld [vmem:[#allocation6 + $0x70] sm:$0xff]
          %v536 = vld [vmem:[#allocation6 + $0x78] sm:$0xff]
          %537 = vst [vmem:[#allocation2] sm:$0xff] %v521
          %538 = vst [vmem:[#allocation2 + $0x8] sm:$0xff] %v522
          %539 = vst [vmem:[#allocation2 + $0x10] sm:$0xff] %v523
          %540 = vst [vmem:[#allocation2 + $0x18] sm:$0xff] %v524
          %541 = vst [vmem:[#allocation2 + $0x20] sm:$0xff] %v525
          %542 = vst [vmem:[#allocation2 + $0x28] sm:$0xff] %v526
          %543 = vst [vmem:[#allocation2 + $0x30] sm:$0xff] %v527
          %544 = vst [vmem:[#allocation2 + $0x38] sm:$0xff] %v528
          %545 = vst [vmem:[#allocation2 + $0x40] sm:$0xff] %v529
          %546 = vst [vmem:[#allocation2 + $0x48] sm:$0xff] %v530
          %547 = vst [vmem:[#allocation2 + $0x50] sm:$0xff] %v531
          %548 = vst [vmem:[#allocation2 + $0x58] sm:$0xff] %v532
          %549 = vst [vmem:[#allocation2 + $0x60] sm:$0xff] %v533
          %550 = vst [vmem:[#allocation2 + $0x68] sm:$0xff] %v534
          %551 = vst [vmem:[#allocation2 + $0x70] sm:$0xff] %v535
          %552 = vst [vmem:[#allocation2 + $0x78] sm:$0xff] %v536
        $region88: #{tpu_custom_call.1} parent=59 // pred_fallthru
          _
        %v553 = vld [vmem:[#allocation3] sm:$0xf]
        %v554 = vld [vmem:[#allocation3 + $0x4] sm:$0xf]
        %v555 = vld [vmem:[#allocation3 + $0x8] sm:$0xf]
        %v556 = vld [vmem:[#allocation3 + $0xc] sm:$0xf]
        %v557 = vld [vmem:[#allocation3 + $0x10] sm:$0xf]
        %v558 = vld [vmem:[#allocation3 + $0x14] sm:$0xf]
        %v559 = vld [vmem:[#allocation3 + $0x18] sm:$0xf]
        %v560 = vld [vmem:[#allocation3 + $0x1c] sm:$0xf]
        %v561 = vld [vmem:[#allocation3 + $0x20] sm:$0xf]
        %v562 = vld [vmem:[#allocation3 + $0x24] sm:$0xf]
        %v563 = vld [vmem:[#allocation3 + $0x28] sm:$0xf]
        %v564 = vld [vmem:[#allocation3 + $0x2c] sm:$0xf]
        %v565 = vld [vmem:[#allocation3 + $0x30] sm:$0xf]
        %v566 = vld [vmem:[#allocation3 + $0x34] sm:$0xf]
        %v567 = vld [vmem:[#allocation3 + $0x38] sm:$0xf]
        %v568 = vld [vmem:[#allocation3 + $0x3c] sm:$0xf]
        %v569 = vld [vmem:[#allocation2] sm:$0xff]
        %v570 = vld [vmem:[#allocation2 + $0x8] sm:$0xff]
        %v571 = vld [vmem:[#allocation2 + $0x10] sm:$0xff]
        %v572 = vld [vmem:[#allocation2 + $0x18] sm:$0xff]
        %v573 = vld [vmem:[#allocation2 + $0x20] sm:$0xff]
        %v574 = vld [vmem:[#allocation2 + $0x28] sm:$0xff]
        %v575 = vld [vmem:[#allocation2 + $0x30] sm:$0xff]
        %v576 = vld [vmem:[#allocation2 + $0x38] sm:$0xff]
        %v577 = vld [vmem:[#allocation2 + $0x40] sm:$0xff]
        %v578 = vld [vmem:[#allocation2 + $0x48] sm:$0xff]
        %v579 = vld [vmem:[#allocation2 + $0x50] sm:$0xff]
        %v580 = vld [vmem:[#allocation2 + $0x58] sm:$0xff]
        %v581 = vld [vmem:[#allocation2 + $0x60] sm:$0xff]
        %v582 = vld [vmem:[#allocation2 + $0x68] sm:$0xff]
        %v583 = vld [vmem:[#allocation2 + $0x70] sm:$0xff]
        %v584 = vld [vmem:[#allocation2 + $0x78] sm:$0xff]
        %v585 = vpack.c.bf16 %v570, %v569
        %v586 = vpack.c.bf16 %v572, %v571
        %v587 = vpack.c.bf16 %v574, %v573
        %v588 = vpack.c.bf16 %v576, %v575
        %v589 = vpack.c.bf16 %v578, %v577
        %v590 = vpack.c.bf16 %v580, %v579
        %v591 = vpack.c.bf16 %v582, %v581
        %v592 = vpack.c.bf16 %v584, %v583
        %v593 = vld [vmem:[#allocation8] sm:$0xff]
        %v594 = vld [vmem:[#allocation8 + $0x8] sm:$0xff]
        %v595 = vld [vmem:[#allocation8 + $0x10] sm:$0xff]
        %v596 = vld [vmem:[#allocation8 + $0x18] sm:$0xff]
        %v597 = vld [vmem:[#allocation8 + $0x20] sm:$0xff]
        %v598 = vld [vmem:[#allocation8 + $0x28] sm:$0xff]
        %v599 = vld [vmem:[#allocation8 + $0x30] sm:$0xff]
        %v600 = vld [vmem:[#allocation8 + $0x38] sm:$0xff]
        %v601 = vld [vmem:[#allocation8 + $0x40] sm:$0xff]
        %v602 = vld [vmem:[#allocation8 + $0x48] sm:$0xff]
        %v603 = vld [vmem:[#allocation8 + $0x50] sm:$0xff]
        %v604 = vld [vmem:[#allocation8 + $0x58] sm:$0xff]
        %v605 = vld [vmem:[#allocation8 + $0x60] sm:$0xff]
        %v606 = vld [vmem:[#allocation8 + $0x68] sm:$0xff]
        %v607 = vld [vmem:[#allocation8 + $0x70] sm:$0xff]
        %v608 = vld [vmem:[#allocation8 + $0x78] sm:$0xff]
        %v625 = vunpack.c.l.b16 %v553
        %v626 = vunpack.c.l.b16 %v554
        %v627 = vunpack.c.l.b16 %v555
        %v628 = vunpack.c.l.b16 %v556
        %v629 = vunpack.c.l.b16 %v557
        %v630 = vunpack.c.l.b16 %v558
        %v631 = vunpack.c.l.b16 %v559
        %v632 = vunpack.c.l.b16 %v560
        %v633 = vunpack.c.l.b16 %v561
        %v634 = vunpack.c.l.b16 %v562
        %v635 = vunpack.c.l.b16 %v563
        %v636 = vunpack.c.l.b16 %v564
        %v637 = vunpack.c.l.b16 %v565
        %v638 = vunpack.c.l.b16 %v566
        %v639 = vunpack.c.l.b16 %v567
        %v640 = vunpack.c.l.b16 %v568
        %v641 = vpack.c.b16 %v626, %v625
        %v642 = vpack.c.b16 %v628, %v627
        %v643 = vpack.c.b16 %v630, %v629
        %v644 = vpack.c.b16 %v632, %v631
        %v645 = vpack.c.b16 %v634, %v633
        %v646 = vpack.c.b16 %v636, %v635
        %v647 = vpack.c.b16 %v638, %v637
        %v648 = vpack.c.b16 %v640, %v639
        %657 = vmatprep.subr.bf16.mxu0 0
        %658 = vmatpush1.bf16.msra.mxu0 %v585
        %659 = vmatprep.subr.bf16.mxu0 0
        %660 = vmatpush1.bf16.msra.mxu0 %v586
        %661 = vmatprep.subr.bf16.mxu0 0
        %662 = vmatpush1.bf16.msra.mxu0 %v587
        %663 = vmatprep.subr.bf16.mxu0 0
        %664 = vmatpush1.bf16.msra.mxu0 %v588
        %665 = vmatprep.subr.bf16.mxu0 0
        %666 = vmatpush1.bf16.msra.mxu0 %v589
        %667 = vmatprep.subr.bf16.mxu0 0
        %668 = vmatpush1.bf16.msra.mxu0 %v590
        %669 = vmatprep.subr.bf16.mxu0 0
        %670 = vmatpush1.bf16.msra.mxu0 %v591
        %671 = vmatprep.subr.bf16.mxu0 0
        %672 = vmatpush1.bf16.msra.mxu0 %v592
        %673 = vmatprep.subr.bf16.mxu0 0
        %674 = vmatpush1.bf16.msra.mxu0 0
        %675 = vmatprep.subr.bf16.mxu0 0
        %676 = vmatpush1.bf16.msra.mxu0 0
        %677 = vmatprep.subr.bf16.mxu0 0
        %678 = vmatpush1.bf16.msra.mxu0 0
        %679 = vmatprep.subr.bf16.mxu0 0
        %680 = vmatpush1.bf16.msra.mxu0 0
        %681 = vmatprep.subr.bf16.mxu0 0
        %682 = vmatpush1.bf16.msra.mxu0 0
        %683 = vmatprep.subr.bf16.mxu0 0
        %684 = vmatpush1.bf16.msra.mxu0 0
        %685 = vmatprep.subr.bf16.mxu0 0
        %686 = vmatpush1.bf16.msra.mxu0 0
        %687 = vmatprep.subr.bf16.mxu0 0
        %688 = vmatpush1.bf16.msra.mxu0 0
        %689 = vmatprep.mubr.bf16.mxu0 0
        %690 = vmatmul.mubr.bf16.gmra.mrb[0].mxu0 %v641
        %v691 = vpop.f32.mrb[0].mxu0
        %v692 = vadd.f32 %v593, %v691
        %v693 = vpop.f32.mrb[0].mxu0
        %v694 = vpop.f32.mrb[0].mxu0
        %v695 = vadd.f32 %v594, %v694
        %v696 = vpop.f32.mrb[0].mxu0
        %697 = vmatprep.mubr.bf16.mxu0 0
        %698 = vmatmul.mubr.bf16.gmra.mrb[0].mxu0 %v642
        %v699 = vpop.f32.mrb[0].mxu0
        %v700 = vadd.f32 %v595, %v699
        %v701 = vpop.f32.mrb[0].mxu0
        %v702 = vpop.f32.mrb[0].mxu0
        %v703 = vadd.f32 %v596, %v702
        %v704 = vpop.f32.mrb[0].mxu0
        %705 = vmatprep.mubr.bf16.mxu0 0
        %706 = vmatmul.mubr.bf16.gmra.mrb[0].mxu0 %v643
        %v707 = vpop.f32.mrb[0].mxu0
        %v708 = vadd.f32 %v597, %v707
        %v709 = vpop.f32.mrb[0].mxu0
        %v710 = vpop.f32.mrb[0].mxu0
        %v711 = vadd.f32 %v598, %v710
        %v712 = vpop.f32.mrb[0].mxu0
        %713 = vmatprep.mubr.bf16.mxu0 0
        %714 = vmatmul.mubr.bf16.gmra.mrb[0].mxu0 %v644
        %v715 = vpop.f32.mrb[0].mxu0
        %v716 = vadd.f32 %v599, %v715
        %v717 = vpop.f32.mrb[0].mxu0
        %v718 = vpop.f32.mrb[0].mxu0
        %v719 = vadd.f32 %v600, %v718
        %v720 = vpop.f32.mrb[0].mxu0
        %721 = vmatprep.mubr.bf16.mxu0 0
        %722 = vmatmul.mubr.bf16.gmra.mrb[0].mxu0 %v645
        %v723 = vpop.f32.mrb[0].mxu0
        %v724 = vadd.f32 %v601, %v723
        %v725 = vpop.f32.mrb[0].mxu0
        %v726 = vpop.f32.mrb[0].mxu0
        %v727 = vadd.f32 %v602, %v726
        %v728 = vpop.f32.mrb[0].mxu0
        %729 = vmatprep.mubr.bf16.mxu0 0
        %730 = vmatmul.mubr.bf16.gmra.mrb[0].mxu0 %v646
        %v731 = vpop.f32.mrb[0].mxu0
        %v732 = vadd.f32 %v603, %v731
        %v733 = vpop.f32.mrb[0].mxu0
        %v734 = vpop.f32.mrb[0].mxu0
        %v735 = vadd.f32 %v604, %v734
        %v736 = vpop.f32.mrb[0].mxu0
        %737 = vmatprep.mubr.bf16.mxu0 0
        %738 = vmatmul.mubr.bf16.gmra.mrb[0].mxu0 %v647
        %v739 = vpop.f32.mrb[0].mxu0
        %v740 = vadd.f32 %v605, %v739
        %v741 = vpop.f32.mrb[0].mxu0
        %v742 = vpop.f32.mrb[0].mxu0
        %v743 = vadd.f32 %v606, %v742
        %v744 = vpop.f32.mrb[0].mxu0
        %745 = vmatprep.mubr.bf16.mxu0 0
        %746 = vmatmul.mubr.bf16.gmra.mrb[0].mxu0 %v648
        %v747 = vpop.f32.mrb[0].mxu0
        %v748 = vadd.f32 %v607, %v747
        %v749 = vpop.f32.mrb[0].mxu0
        %v750 = vpop.f32.mrb[0].mxu0
        %v751 = vadd.f32 %v608, %v750
        %v752 = vpop.f32.mrb[0].mxu0
        %753 = vdwg.mxu0
        %v754 = vpack.c.bf16 %v695, %v692
        %v755 = vpack.c.bf16 %v703, %v700
        %v756 = vpack.c.bf16 %v711, %v708
        %v757 = vpack.c.bf16 %v719, %v716
        %v758 = vpack.c.bf16 %v727, %v724
        %v759 = vpack.c.bf16 %v735, %v732
        %v760 = vpack.c.bf16 %v743, %v740
        %v761 = vpack.c.bf16 %v751, %v748
        %v762 = vld [vmem:[%s452] sm:$0xf]
        %v763 = vld [vmem:[%s452 + $0x4] sm:$0xf]
        %v764 = vld [vmem:[%s452 + $0x8] sm:$0xf]
        %v765 = vld [vmem:[%s452 + $0xc] sm:$0xf]
        %v766 = vld [vmem:[%s452 + $0x10] sm:$0xf]
        %v767 = vld [vmem:[%s452 + $0x14] sm:$0xf]
        %v768 = vld [vmem:[%s452 + $0x18] sm:$0xf]
        %v769 = vld [vmem:[%s452 + $0x1c] sm:$0xf]
        %v770 = vld [vmem:[%s452 + $0x20] sm:$0xf]
        %v771 = vld [vmem:[%s452 + $0x24] sm:$0xf]
        %v772 = vld [vmem:[%s452 + $0x28] sm:$0xf]
        %v773 = vld [vmem:[%s452 + $0x2c] sm:$0xf]
        %v774 = vld [vmem:[%s452 + $0x30] sm:$0xf]
        %v775 = vld [vmem:[%s452 + $0x34] sm:$0xf]
        %v776 = vld [vmem:[%s452 + $0x38] sm:$0xf]
        %v777 = vld [vmem:[%s452 + $0x3c] sm:$0xf]
        %v778 = vld [vmem:[%s512] sm:$0x1]
        %v780 = vlaneseq
        %v781 = vshrl.u32 %v780, 7
        %v782 = vsub.s32 0, %v781
        %v783 = vrot.slane %v778, %v782
        %v801 = vunpack.c.l.b16 %v762
        %v802 = vunpack.c.l.b16 %v763
        %v803 = vunpack.c.l.b16 %v764
        %v804 = vunpack.c.l.b16 %v765
        %v805 = vunpack.c.l.b16 %v766
        %v806 = vunpack.c.l.b16 %v767
        %v807 = vunpack.c.l.b16 %v768
        %v808 = vunpack.c.l.b16 %v769
        %v809 = vunpack.c.l.b16 %v770
        %v810 = vunpack.c.l.b16 %v771
        %v811 = vunpack.c.l.b16 %v772
        %v812 = vunpack.c.l.b16 %v773
        %v813 = vunpack.c.l.b16 %v774
        %v814 = vunpack.c.l.b16 %v775
        %v815 = vunpack.c.l.b16 %v776
        %v816 = vunpack.c.l.b16 %v777
        %v817 = vpack.c.b16 %v802, %v801
        %v818 = vpack.c.b16 %v804, %v803
        %v819 = vpack.c.b16 %v806, %v805
        %v820 = vpack.c.b16 %v808, %v807
        %v821 = vpack.c.b16 %v810, %v809
        %v822 = vpack.c.b16 %v812, %v811
        %v823 = vpack.c.b16 %v814, %v813
        %v824 = vpack.c.b16 %v816, %v815
        %833 = vmatprep.subr.bf16.mxu0 0
        %834 = vmatpush1.bf16.msra.mxu0 %v817
        %835 = vmatprep.subr.bf16.mxu0 0
        %836 = vmatpush1.bf16.msra.mxu0 %v818
        %837 = vmatprep.subr.bf16.mxu0 0
        %838 = vmatpush1.bf16.msra.mxu0 %v819
        %839 = vmatprep.subr.bf16.mxu0 0
        %840 = vmatpush1.bf16.msra.mxu0 %v820
        %841 = vmatprep.subr.bf16.mxu0 0
        %842 = vmatpush1.bf16.msra.mxu0 %v821
        %843 = vmatprep.subr.bf16.mxu0 0
        %844 = vmatpush1.bf16.msra.mxu0 %v822
        %845 = vmatprep.subr.bf16.mxu0 0
        %846 = vmatpush1.bf16.msra.mxu0 %v823
        %847 = vmatprep.subr.bf16.mxu0 0
        %848 = vmatpush1.bf16.msra.mxu0 %v824
        %849 = vmatprep.subr.bf16.mxu0 0
        %850 = vmatpush1.bf16.msra.mxu0 0
        %851 = vmatprep.subr.bf16.mxu0 0
        %852 = vmatpush1.bf16.msra.mxu0 0
        %853 = vmatprep.subr.bf16.mxu0 0
        %854 = vmatpush1.bf16.msra.mxu0 0
        %855 = vmatprep.subr.bf16.mxu0 0
        %856 = vmatpush1.bf16.msra.mxu0 0
        %857 = vmatprep.subr.bf16.mxu0 0
        %858 = vmatpush1.bf16.msra.mxu0 0
        %859 = vmatprep.subr.bf16.mxu0 0
        %860 = vmatpush1.bf16.msra.mxu0 0
        %861 = vmatprep.subr.bf16.mxu0 0
        %862 = vmatpush1.bf16.msra.mxu0 0
        %863 = vmatprep.subr.bf16.mxu0 0
        %864 = vmatpush1.bf16.msra.mxu0 0
        %865 = vmatprep.mubr.bf16.mxu0 0
        %866 = vmatmul.mubr.bf16.gmra.mrb[0].mxu0 %v754
        %v867 = vpop.f32.mrb[0].mxu0
        %v868 = vadd.f32 %v783, %v867
        %v869 = vpop.f32.mrb[0].mxu0
        %v870 = vpop.f32.mrb[0].mxu0
        %v871 = vadd.f32 %v783, %v870
        %v872 = vpop.f32.mrb[0].mxu0
        %873 = vmatprep.mubr.bf16.mxu0 0
        %874 = vmatmul.mubr.bf16.gmra.mrb[0].mxu0 %v755
        %v875 = vpop.f32.mrb[0].mxu0
        %v876 = vadd.f32 %v783, %v875
        %v877 = vpop.f32.mrb[0].mxu0
        %v878 = vpop.f32.mrb[0].mxu0
        %v879 = vadd.f32 %v783, %v878
        %v880 = vpop.f32.mrb[0].mxu0
        %881 = vmatprep.mubr.bf16.mxu0 0
        %882 = vmatmul.mubr.bf16.gmra.mrb[0].mxu0 %v756
        %v883 = vpop.f32.mrb[0].mxu0
        %v884 = vadd.f32 %v783, %v883
        %v885 = vpop.f32.mrb[0].mxu0
        %v886 = vpop.f32.mrb[0].mxu0
        %v887 = vadd.f32 %v783, %v886
        %v888 = vpop.f32.mrb[0].mxu0
        %889 = vmatprep.mubr.bf16.mxu0 0
        %890 = vmatmul.mubr.bf16.gmra.mrb[0].mxu0 %v757
        %v891 = vpop.f32.mrb[0].mxu0
        %v892 = vadd.f32 %v783, %v891
        %v893 = vpop.f32.mrb[0].mxu0
        %v894 = vpop.f32.mrb[0].mxu0
        %v895 = vadd.f32 %v783, %v894
        %v896 = vpop.f32.mrb[0].mxu0
        %897 = vmatprep.mubr.bf16.mxu0 0
        %898 = vmatmul.mubr.bf16.gmra.mrb[0].mxu0 %v758
        %v899 = vpop.f32.mrb[0].mxu0
        %v900 = vadd.f32 %v783, %v899
        %v901 = vpop.f32.mrb[0].mxu0
        %v902 = vpop.f32.mrb[0].mxu0
        %v903 = vadd.f32 %v783, %v902
        %v904 = vpop.f32.mrb[0].mxu0
        %905 = vmatprep.mubr.bf16.mxu0 0
        %906 = vmatmul.mubr.bf16.gmra.mrb[0].mxu0 %v759
        %v907 = vpop.f32.mrb[0].mxu0
        %v908 = vadd.f32 %v783, %v907
        %v909 = vpop.f32.mrb[0].mxu0
        %v910 = vpop.f32.mrb[0].mxu0
        %v911 = vadd.f32 %v783, %v910
        %v912 = vpop.f32.mrb[0].mxu0
        %913 = vmatprep.mubr.bf16.mxu0 0
        %914 = vmatmul.mubr.bf16.gmra.mrb[0].mxu0 %v760
        %v915 = vpop.f32.mrb[0].mxu0
        %v916 = vadd.f32 %v783, %v915
        %v917 = vpop.f32.mrb[0].mxu0
        %v918 = vpop.f32.mrb[0].mxu0
        %v919 = vadd.f32 %v783, %v918
        %v920 = vpop.f32.mrb[0].mxu0
        %921 = vmatprep.mubr.bf16.mxu0 0
        %922 = vmatmul.mubr.bf16.gmra.mrb[0].mxu0 %v761
        %v923 = vpop.f32.mrb[0].mxu0
        %v924 = vadd.f32 %v783, %v923
        %v925 = vpop.f32.mrb[0].mxu0
        %v926 = vpop.f32.mrb[0].mxu0
        %v927 = vadd.f32 %v783, %v926
        %v928 = vpop.f32.mrb[0].mxu0
        %929 = vdwg.mxu0
        %v930 = vmax.f32 %v868, 0.0
        %v931 = vmax.f32 %v871, 0.0
        %v932 = vmax.f32 %v876, 0.0
        %v933 = vmax.f32 %v879, 0.0
        %v934 = vmax.f32 %v884, 0.0
        %v935 = vmax.f32 %v887, 0.0
        %v936 = vmax.f32 %v892, 0.0
        %v937 = vmax.f32 %v895, 0.0
        %v938 = vmax.f32 %v900, 0.0
        %v939 = vmax.f32 %v903, 0.0
        %v940 = vmax.f32 %v908, 0.0
        %v941 = vmax.f32 %v911, 0.0
        %v942 = vmax.f32 %v916, 0.0
        %v943 = vmax.f32 %v919, 0.0
        %v944 = vmax.f32 %v924, 0.0
        %v945 = vmax.f32 %v927, 0.0
        %v946 = vpack.c.bf16 %v931, %v930
        %v947 = vpack.c.bf16 %v933, %v932
        %v948 = vpack.c.bf16 %v935, %v934
        %v949 = vpack.c.bf16 %v937, %v936
        %v950 = vpack.c.bf16 %v939, %v938
        %v951 = vpack.c.bf16 %v941, %v940
        %v952 = vpack.c.bf16 %v943, %v942
        %v953 = vpack.c.bf16 %v945, %v944
        %v954 = vld [vmem:[%s461] sm:$0xf]
        %v955 = vld [vmem:[%s461 + $0x4] sm:$0xf]
        %v956 = vld [vmem:[%s461 + $0x8] sm:$0xf]
        %v957 = vld [vmem:[%s461 + $0xc] sm:$0xf]
        %v958 = vld [vmem:[%s461 + $0x10] sm:$0xf]
        %v959 = vld [vmem:[%s461 + $0x14] sm:$0xf]
        %v960 = vld [vmem:[%s461 + $0x18] sm:$0xf]
        %v961 = vld [vmem:[%s461 + $0x1c] sm:$0xf]
        %v962 = vld [vmem:[%s461 + $0x20] sm:$0xf]
        %v963 = vld [vmem:[%s461 + $0x24] sm:$0xf]
        %v964 = vld [vmem:[%s461 + $0x28] sm:$0xf]
        %v965 = vld [vmem:[%s461 + $0x2c] sm:$0xf]
        %v966 = vld [vmem:[%s461 + $0x30] sm:$0xf]
        %v967 = vld [vmem:[%s461 + $0x34] sm:$0xf]
        %v968 = vld [vmem:[%s461 + $0x38] sm:$0xf]
        %v969 = vld [vmem:[%s461 + $0x3c] sm:$0xf]
        %v970 = vld [vmem:[%s515] sm:$0x1]
        %v972 = vlaneseq
        %v973 = vshrl.u32 %v972, 7
        %v974 = vsub.s32 0, %v973
        %v975 = vrot.slane %v970, %v974
        %v993 = vunpack.c.l.b16 %v954
        %v994 = vunpack.c.l.b16 %v955
        %v995 = vunpack.c.l.b16 %v956
        %v996 = vunpack.c.l.b16 %v957
        %v997 = vunpack.c.l.b16 %v958
        %v998 = vunpack.c.l.b16 %v959
        %v999 = vunpack.c.l.b16 %v960
        %v1000 = vunpack.c.l.b16 %v961
        %v1001 = vunpack.c.l.b16 %v962
        %v1002 = vunpack.c.l.b16 %v963
        %v1003 = vunpack.c.l.b16 %v964
        %v1004 = vunpack.c.l.b16 %v965
        %v1005 = vunpack.c.l.b16 %v966
        %v1006 = vunpack.c.l.b16 %v967
        %v1007 = vunpack.c.l.b16 %v968
        %v1008 = vunpack.c.l.b16 %v969
        %v1009 = vpack.c.b16 %v994, %v993
        %v1010 = vpack.c.b16 %v996, %v995
        %v1011 = vpack.c.b16 %v998, %v997
        %v1012 = vpack.c.b16 %v1000, %v999
        %v1013 = vpack.c.b16 %v1002, %v1001
        %v1014 = vpack.c.b16 %v1004, %v1003
        %v1015 = vpack.c.b16 %v1006, %v1005
        %v1016 = vpack.c.b16 %v1008, %v1007
        %1025 = vmatprep.subr.bf16.mxu0 0
        %1026 = vmatpush1.bf16.msra.mxu0 %v1009
        %1027 = vmatprep.subr.bf16.mxu0 0
        %1028 = vmatpush1.bf16.msra.mxu0 %v1010
        %1029 = vmatprep.subr.bf16.mxu0 0
        %1030 = vmatpush1.bf16.msra.mxu0 %v1011
        %1031 = vmatprep.subr.bf16.mxu0 0
        %1032 = vmatpush1.bf16.msra.mxu0 %v1012
        %1033 = vmatprep.subr.bf16.mxu0 0
        %1034 = vmatpush1.bf16.msra.mxu0 %v1013
        %1035 = vmatprep.subr.bf16.mxu0 0
        %1036 = vmatpush1.bf16.msra.mxu0 %v1014
        %1037 = vmatprep.subr.bf16.mxu0 0
        %1038 = vmatpush1.bf16.msra.mxu0 %v1015
        %1039 = vmatprep.subr.bf16.mxu0 0
        %1040 = vmatpush1.bf16.msra.mxu0 %v1016
        %1041 = vmatprep.subr.bf16.mxu0 0
        %1042 = vmatpush1.bf16.msra.mxu0 0
        %1043 = vmatprep.subr.bf16.mxu0 0
        %1044 = vmatpush1.bf16.msra.mxu0 0
        %1045 = vmatprep.subr.bf16.mxu0 0
        %1046 = vmatpush1.bf16.msra.mxu0 0
        %1047 = vmatprep.subr.bf16.mxu0 0
        %1048 = vmatpush1.bf16.msra.mxu0 0
        %1049 = vmatprep.subr.bf16.mxu0 0
        %1050 = vmatpush1.bf16.msra.mxu0 0
        %1051 = vmatprep.subr.bf16.mxu0 0
        %1052 = vmatpush1.bf16.msra.mxu0 0
        %1053 = vmatprep.subr.bf16.mxu0 0
        %1054 = vmatpush1.bf16.msra.mxu0 0
        %1055 = vmatprep.subr.bf16.mxu0 0
        %1056 = vmatpush1.bf16.msra.mxu0 0
        %1057 = vmatprep.mubr.bf16.mxu0 0
        %1058 = vmatmul.mubr.bf16.gmra.mrb[0].mxu0 %v946
        %v1059 = vpop.f32.mrb[0].mxu0
        %v1060 = vadd.f32 %v975, %v1059
        %v1061 = vpop.f32.mrb[0].mxu0
        %v1062 = vpop.f32.mrb[0].mxu0
        %v1063 = vadd.f32 %v975, %v1062
        %v1064 = vpop.f32.mrb[0].mxu0
        %1065 = vmatprep.mubr.bf16.mxu0 0
        %1066 = vmatmul.mubr.bf16.gmra.mrb[0].mxu0 %v947
        %v1067 = vpop.f32.mrb[0].mxu0
        %v1068 = vadd.f32 %v975, %v1067
        %v1069 = vpop.f32.mrb[0].mxu0
        %v1070 = vpop.f32.mrb[0].mxu0
        %v1071 = vadd.f32 %v975, %v1070
        %v1072 = vpop.f32.mrb[0].mxu0
        %1073 = vmatprep.mubr.bf16.mxu0 0
        %1074 = vmatmul.mubr.bf16.gmra.mrb[0].mxu0 %v948
        %v1075 = vpop.f32.mrb[0].mxu0
        %v1076 = vadd.f32 %v975, %v1075
        %v1077 = vpop.f32.mrb[0].mxu0
        %v1078 = vpop.f32.mrb[0].mxu0
        %v1079 = vadd.f32 %v975, %v1078
        %v1080 = vpop.f32.mrb[0].mxu0
        %1081 = vmatprep.mubr.bf16.mxu0 0
        %1082 = vmatmul.mubr.bf16.gmra.mrb[0].mxu0 %v949
        %v1083 = vpop.f32.mrb[0].mxu0
        %v1084 = vadd.f32 %v975, %v1083
        %v1085 = vpop.f32.mrb[0].mxu0
        %v1086 = vpop.f32.mrb[0].mxu0
        %v1087 = vadd.f32 %v975, %v1086
        %v1088 = vpop.f32.mrb[0].mxu0
        %1089 = vmatprep.mubr.bf16.mxu0 0
        %1090 = vmatmul.mubr.bf16.gmra.mrb[0].mxu0 %v950
        %v1091 = vpop.f32.mrb[0].mxu0
        %v1092 = vadd.f32 %v975, %v1091
        %v1093 = vpop.f32.mrb[0].mxu0
        %v1094 = vpop.f32.mrb[0].mxu0
        %v1095 = vadd.f32 %v975, %v1094
        %v1096 = vpop.f32.mrb[0].mxu0
        %1097 = vmatprep.mubr.bf16.mxu0 0
        %1098 = vmatmul.mubr.bf16.gmra.mrb[0].mxu0 %v951
        %v1099 = vpop.f32.mrb[0].mxu0
        %v1100 = vadd.f32 %v975, %v1099
        %v1101 = vpop.f32.mrb[0].mxu0
        %v1102 = vpop.f32.mrb[0].mxu0
        %v1103 = vadd.f32 %v975, %v1102
        %v1104 = vpop.f32.mrb[0].mxu0
        %1105 = vmatprep.mubr.bf16.mxu0 0
        %1106 = vmatmul.mubr.bf16.gmra.mrb[0].mxu0 %v952
        %v1107 = vpop.f32.mrb[0].mxu0
        %v1108 = vadd.f32 %v975, %v1107
        %v1109 = vpop.f32.mrb[0].mxu0
        %v1110 = vpop.f32.mrb[0].mxu0
        %v1111 = vadd.f32 %v975, %v1110
        %v1112 = vpop.f32.mrb[0].mxu0
        %1113 = vmatprep.mubr.bf16.mxu0 0
        %1114 = vmatmul.mubr.bf16.gmra.mrb[0].mxu0 %v953
        %v1115 = vpop.f32.mrb[0].mxu0
        %v1116 = vadd.f32 %v975, %v1115
        %v1117 = vpop.f32.mrb[0].mxu0
        %v1118 = vpop.f32.mrb[0].mxu0
        %v1119 = vadd.f32 %v975, %v1118
        %v1120 = vpop.f32.mrb[0].mxu0
        %1121 = vdwg.mxu0
        %p1122 = scmp.eq.s32.totalorder %s31, 2
        %p1123 = scmp.ne.s32.totalorder %s31, 2
        // Predicated region
        $region89: #{tpu_custom_call.1} parent=59 // pred_check
          %p1124 = pneg %p1123
        $region90: #{tpu_custom_call.1} parent=59 // pred_check_branch
          %1126 = sbr.rel (%p1124) target = $region92
        $region91: #{tpu_custom_call.1} parent=59 // pred_region
          %v1127 = vmax.f32 %v1060, 0.0
          %v1128 = vmax.f32 %v1063, 0.0
          %v1129 = vmax.f32 %v1068, 0.0
          %v1130 = vmax.f32 %v1071, 0.0
          %v1131 = vmax.f32 %v1076, 0.0
          %v1132 = vmax.f32 %v1079, 0.0
          %v1133 = vmax.f32 %v1084, 0.0
          %v1134 = vmax.f32 %v1087, 0.0
          %v1135 = vmax.f32 %v1092, 0.0
          %v1136 = vmax.f32 %v1095, 0.0
          %v1137 = vmax.f32 %v1100, 0.0
          %v1138 = vmax.f32 %v1103, 0.0
          %v1139 = vmax.f32 %v1108, 0.0
          %v1140 = vmax.f32 %v1111, 0.0
          %v1141 = vmax.f32 %v1116, 0.0
          %v1142 = vmax.f32 %v1119, 0.0
          %1143 = vst [vmem:[#allocation2] sm:$0xff] %v1127
          %1144 = vst [vmem:[#allocation2 + $0x8] sm:$0xff] %v1128
          %1145 = vst [vmem:[#allocation2 + $0x10] sm:$0xff] %v1129
          %1146 = vst [vmem:[#allocation2 + $0x18] sm:$0xff] %v1130
          %1147 = vst [vmem:[#allocation2 + $0x20] sm:$0xff] %v1131
          %1148 = vst [vmem:[#allocation2 + $0x28] sm:$0xff] %v1132
          %1149 = vst [vmem:[#allocation2 + $0x30] sm:$0xff] %v1133
          %1150 = vst [vmem:[#allocation2 + $0x38] sm:$0xff] %v1134
          %1151 = vst [vmem:[#allocation2 + $0x40] sm:$0xff] %v1135
          %1152 = vst [vmem:[#allocation2 + $0x48] sm:$0xff] %v1136
          %1153 = vst [vmem:[#allocation2 + $0x50] sm:$0xff] %v1137
          %1154 = vst [vmem:[#allocation2 + $0x58] sm:$0xff] %v1138
          %1155 = vst [vmem:[#allocation2 + $0x60] sm:$0xff] %v1139
          %1156 = vst [vmem:[#allocation2 + $0x68] sm:$0xff] %v1140
          %1157 = vst [vmem:[#allocation2 + $0x70] sm:$0xff] %v1141
          %1158 = vst [vmem:[#allocation2 + $0x78] sm:$0xff] %v1142
        $region92: #{tpu_custom_call.1} parent=59 // pred_fallthru
          _
        // Predicated region
        $region93: #{tpu_custom_call.1} parent=59 // pred_check
          %p1159 = pneg %p1122
        $region94: #{tpu_custom_call.1} parent=59 // pred_check_branch
          %1161 = sbr.rel (%p1159) target = $region96
        $region95: #{tpu_custom_call.1} parent=59 // pred_region
          %v1162 = vld [vmem:[%s7] sm:$0xf]
          %v1163 = vpack.c.bf16 %v1063, %v1060
          %v1164 = vpack.c.bf16 %v1071, %v1068
          %v1165 = vpack.c.bf16 %v1079, %v1076
          %v1166 = vpack.c.bf16 %v1087, %v1084
          %v1167 = vpack.c.bf16 %v1095, %v1092
          %v1168 = vpack.c.bf16 %v1103, %v1100
          %v1169 = vpack.c.bf16 %v1111, %v1108
          %v1170 = vpack.c.bf16 %v1119, %v1116
          %1171 = vmatprep.subr.bf16.mxu0 0
          %1172 = vmatpush1.bf16.msra.mxu0 %v1163
          %1173 = vmatprep.subr.bf16.mxu0 0
          %1174 = vmatpush1.bf16.msra.mxu0 %v1164
          %1175 = vmatprep.subr.bf16.mxu0 0
          %1176 = vmatpush1.bf16.msra.mxu0 %v1165
          %1177 = vmatprep.subr.bf16.mxu0 0
          %1178 = vmatpush1.bf16.msra.mxu0 %v1166
          %1179 = vmatprep.subr.bf16.mxu0 0
          %1180 = vmatpush1.bf16.msra.mxu0 %v1167
          %1181 = vmatprep.subr.bf16.mxu0 0
          %1182 = vmatpush1.bf16.msra.mxu0 %v1168
          %1183 = vmatprep.subr.bf16.mxu0 0
          %1184 = vmatpush1.bf16.msra.mxu0 %v1169
          %1185 = vmatprep.subr.bf16.mxu0 0
          %1186 = vmatpush1.bf16.msra.mxu0 %v1170
          %1187 = vmatprep.subr.bf16.mxu0 0
          %1188 = vmatpush1.bf16.msra.mxu0 0
          %1189 = vmatprep.subr.bf16.mxu0 0
          %1190 = vmatpush1.bf16.msra.mxu0 0
          %1191 = vmatprep.subr.bf16.mxu0 0
          %1192 = vmatpush1.bf16.msra.mxu0 0
          %1193 = vmatprep.subr.bf16.mxu0 0
          %1194 = vmatpush1.bf16.msra.mxu0 0
          %1195 = vmatprep.subr.bf16.mxu0 0
          %1196 = vmatpush1.bf16.msra.mxu0 0
          %1197 = vmatprep.subr.bf16.mxu0 0
          %1198 = vmatpush1.bf16.msra.mxu0 0
          %1199 = vmatprep.subr.bf16.mxu0 0
          %1200 = vmatpush1.bf16.msra.mxu0 0
          %1201 = vmatprep.subr.bf16.mxu0 0
          %1202 = vmatpush1.bf16.msra.mxu0 0
          %1203 = vmatprep.mubr.bf16.mxu0 0
          %1204 = vmatmul.mubr.bf16.gmra.mrb[0].mxu0 %v1162
          %v1205 = vpop.f32.mrb[0].mxu0
          %v1206 = vadd.f32 0.0, %v1205
          %v1207 = vpop.f32.mrb[0].mxu0
          %v1208 = vpop.f32.mrb[0].mxu0
          %v1209 = vpop.f32.mrb[0].mxu0
          %1210 = vdwg.mxu0
          %1211 = vst [vmem:[#allocation14] sm:$0xff] %v1206
          %v1212 = vpack.c.bf16 %v1206, %v1206
          %v1213 = vld [vmem:[#allocation12] sm:$0xf]
          %v1214 = vld [vmem:[#allocation12 + $0x4] sm:$0xf]
          %v1215 = vld [vmem:[#allocation12 + $0x8] sm:$0xf]
          %v1216 = vld [vmem:[#allocation12 + $0xc] sm:$0xf]
          %v1217 = vld [vmem:[#allocation12 + $0x10] sm:$0xf]
          %v1218 = vld [vmem:[#allocation12 + $0x14] sm:$0xf]
          %v1219 = vld [vmem:[#allocation12 + $0x18] sm:$0xf]
          %v1220 = vld [vmem:[#allocation12 + $0x1c] sm:$0xf]
          %v1221 = vld [vmem:[#allocation12 + $0x20] sm:$0xf]
          %v1222 = vld [vmem:[#allocation12 + $0x24] sm:$0xf]
          %v1223 = vld [vmem:[#allocation12 + $0x28] sm:$0xf]
          %v1224 = vld [vmem:[#allocation12 + $0x2c] sm:$0xf]
          %v1225 = vld [vmem:[#allocation12 + $0x30] sm:$0xf]
          %v1226 = vld [vmem:[#allocation12 + $0x34] sm:$0xf]
          %v1227 = vld [vmem:[#allocation12 + $0x38] sm:$0xf]
          %v1228 = vld [vmem:[#allocation12 + $0x3c] sm:$0xf]
          %v1229 = vld [vmem:[%s9] sm:$0x1]
          %v1231 = vlaneseq
          %v1232 = vshrl.u32 %v1231, 7
          %v1233 = vsub.s32 0, %v1232
          %v1234 = vrot.slane %v1229, %v1233
          %v1252 = vunpack.c.l.b16 %v1213
          %v1253 = vunpack.c.l.b16 %v1214
          %v1254 = vunpack.c.l.b16 %v1215
          %v1255 = vunpack.c.l.b16 %v1216
          %v1256 = vunpack.c.l.b16 %v1217
          %v1257 = vunpack.c.l.b16 %v1218
          %v1258 = vunpack.c.l.b16 %v1219
          %v1259 = vunpack.c.l.b16 %v1220
          %v1260 = vunpack.c.l.b16 %v1221
          %v1261 = vunpack.c.l.b16 %v1222
          %v1262 = vunpack.c.l.b16 %v1223
          %v1263 = vunpack.c.l.b16 %v1224
          %v1264 = vunpack.c.l.b16 %v1225
          %v1265 = vunpack.c.l.b16 %v1226
          %v1266 = vunpack.c.l.b16 %v1227
          %v1267 = vunpack.c.l.b16 %v1228
          %v1268 = vpack.c.b16 %v1253, %v1252
          %v1269 = vpack.c.b16 %v1255, %v1254
          %v1270 = vpack.c.b16 %v1257, %v1256
          %v1271 = vpack.c.b16 %v1259, %v1258
          %v1272 = vpack.c.b16 %v1261, %v1260
          %v1273 = vpack.c.b16 %v1263, %v1262
          %v1274 = vpack.c.b16 %v1265, %v1264
          %v1275 = vpack.c.b16 %v1267, %v1266
          %1284 = vmatprep.subr.bf16.mxu0 0
          %1285 = vmatpush1.bf16.msra.mxu0 %v1268
          %1286 = vmatprep.subr.bf16.mxu0 0
          %1287 = vmatpush1.bf16.msra.mxu0 %v1269
          %1288 = vmatprep.subr.bf16.mxu0 0
          %1289 = vmatpush1.bf16.msra.mxu0 %v1270
          %1290 = vmatprep.subr.bf16.mxu0 0
          %1291 = vmatpush1.bf16.msra.mxu0 %v1271
          %1292 = vmatprep.subr.bf16.mxu0 0
          %1293 = vmatpush1.bf16.msra.mxu0 %v1272
          %1294 = vmatprep.subr.bf16.mxu0 0
          %1295 = vmatpush1.bf16.msra.mxu0 %v1273
          %1296 = vmatprep.subr.bf16.mxu0 0
          %1297 = vmatpush1.bf16.msra.mxu0 %v1274
          %1298 = vmatprep.subr.bf16.mxu0 0
          %1299 = vmatpush1.bf16.msra.mxu0 %v1275
          %1300 = vmatprep.subr.bf16.mxu0 0
          %1301 = vmatpush1.bf16.msra.mxu0 0
          %1302 = vmatprep.subr.bf16.mxu0 0
          %1303 = vmatpush1.bf16.msra.mxu0 0
          %1304 = vmatprep.subr.bf16.mxu0 0
          %1305 = vmatpush1.bf16.msra.mxu0 0
          %1306 = vmatprep.subr.bf16.mxu0 0
          %1307 = vmatpush1.bf16.msra.mxu0 0
          %1308 = vmatprep.subr.bf16.mxu0 0
          %1309 = vmatpush1.bf16.msra.mxu0 0
          %1310 = vmatprep.subr.bf16.mxu0 0
          %1311 = vmatpush1.bf16.msra.mxu0 0
          %1312 = vmatprep.subr.bf16.mxu0 0
          %1313 = vmatpush1.bf16.msra.mxu0 0
          %1314 = vmatprep.subr.bf16.mxu0 0
          %1315 = vmatpush1.bf16.msra.mxu0 0
          %1316 = vmatprep.mubr.bf16.mxu0 0
          %1317 = vmatmul.mubr.bf16.gmra.mrb[0].mxu0 %v1212
          %v1318 = vpop.f32.mrb[0].mxu0
          %v1319 = vadd.f32 %v1234, %v1318
          %v1320 = vpop.f32.mrb[0].mxu0
          %v1321 = vpop.f32.mrb[0].mxu0
          %v1322 = vpop.f32.mrb[0].mxu0
          %1323 = vdwg.mxu0
          %1324 = vst [vmem:[#allocation15] sm:$0xff] %v1319
        $region96: #{tpu_custom_call.1} parent=59 // pred_fallthru
          _
        // Predicated region
        $region97: #{tpu_custom_call.1} parent=59 // pred_check
          %p1325 = pneg %p274
        $region98: #{tpu_custom_call.1} parent=59 // pred_check_branch
          %1327 = sbr.rel (%p1325) target = $region100
        $region99: #{tpu_custom_call.1} parent=59 // pred_region
          %s1329 = ssub.s32 128, 128
          %1330 = vsyncadd [#allocation5], %s1329
          %s1332 = sshll.u32 [#allocation14], 4
          %s1333 = int_to_ptr.vmem [resolvable:$true] %s1332
          %1335 = dma.vmem_to_hbm [thread:$0]  %s1333, 128, %s10, [#allocation5]
        $region100: #{tpu_custom_call.1} parent=59 // pred_fallthru
          _
        // Predicated region
        $region101: #{tpu_custom_call.1} parent=59 // pred_check
          %p1336 = pneg %p295
        $region102: #{tpu_custom_call.1} parent=59 // pred_check_branch
          %1338 = sbr.rel (%p1336) target = $region104
        $region103: #{tpu_custom_call.1} parent=59 // pred_region
          %s1340 = ssub.s32 128, 128
          %1341 = vsyncadd [#allocation16], %s1340
          %s1343 = sshll.u32 [#allocation15], 4
          %s1344 = int_to_ptr.vmem [resolvable:$true] %s1343
          %1346 = dma.vmem_to_hbm [thread:$0]  %s1344, 128, %s11, [#allocation16]
        $region104: #{tpu_custom_call.1} parent=59 // pred_fallthru
          _
        // Predicated region
        $region105: #{tpu_custom_call.1} parent=59 // pred_check
          %p1347 = pneg %p274
        $region106: #{tpu_custom_call.1} parent=59 // pred_check_branch
          %1349 = sbr.rel (%p1347) target = $region108
        $region107: #{tpu_custom_call.1} parent=59 // pred_region
          %1350 = dma.done [#allocation5], 128
        $region108: #{tpu_custom_call.1} parent=59 // pred_fallthru
          _
        // Predicated region
        $region109: #{tpu_custom_call.1} parent=59 // pred_check
          %p1351 = pneg %p295
        $region110: #{tpu_custom_call.1} parent=59 // pred_check_branch
          %1353 = sbr.rel (%p1351) target = $region112
        $region111: #{tpu_custom_call.1} parent=59 // pred_region
          %1354 = dma.done [#allocation16], 128
        $region112: #{tpu_custom_call.1} parent=59 // pred_fallthru
          _
      $region60: #{tpu_custom_call.1} parent=5 // pred_fallthru
        _
      %p1355 = scmp.le.s32.totalorder 2, %s26
      // Predicated region
      $region113: #{tpu_custom_call.1} parent=5 // pred_check
        %p1356 = pneg %p1355
      $region114: #{tpu_custom_call.1} parent=5 // pred_check_branch
        %1358 = sbr.rel (%p1356) target = $region116
      $region115: #{tpu_custom_call.1} parent=5 // pred_region
        %s1359 = ssub.s32 %s26, 2
      $region116: #{tpu_custom_call.1} parent=5 // pred_fallthru
        _
    $region6: #{tpu_custom_call.1} parent=1 // loop_footer
      %s30 = sadd.s32 1, %s26
    $region7: #{tpu_custom_call.1} parent=1 // loop_footer_branch
      %25 = sbr.rel target = $region3
    $region8: #{tpu_custom_call.1} parent=1 // loop_exit
      _
    %1360 = vsyncpa [#allocation4], 1
    %s1361 = scalar_lea.sflag [#allocation4], 1
    %1362 = vsyncpa %s1361, 1
    %1363 = vsyncpa [#allocation7], 1
    %1364 = vsyncpa [#allocation10], 1
    %s1365 = scalar_lea.sflag [#allocation10], 1
    %1366 = vsyncpa %s1365, 1
    %1367 = vsyncpa [#allocation13], 1
    %1368 = vsyncpa [#allocation5], 1
    %s1369 = scalar_lea.sflag [#allocation5], 1
    %1370 = vsyncpa %s1369, 1
    %1371 = vsyncpa [#allocation16], 1

</llo_original>
